<compile_context>
chip_gen: v7x
topology: tpu7x:2x2x1
jax: 0.10.0
libtpu: 0.0.40
codegen_flags: <defaults>
</compile_context>

<pallas_src>
import functools

import jax
import jax.numpy as jnp
from jax.experimental import pallas as pl
from jax.experimental.pallas import tpu as pltpu


# ------------------------------ helpers ------------------------------------ #

_PARAM_KEYS = ("w1", "b1", "w2", "b2", "w3", "b3", "w4", "b4")


def _round_up(n, m):
    return ((n + m - 1) // m) * m


def _batch_tile(b):
    # Up to 512 rows per grid step (amortizes per-step overhead, fits v7x 64 MiB VMEM);
    # small batches round up to 16 rows (bf16 sublane packing).
    return 512 if b >= 512 else _round_up(b, 16)


def _pad2d(a, rows, cols):
    r, c = a.shape
    if r == rows and c == cols:
        return a
    return jnp.pad(a, ((0, rows - r), (0, cols - c)))


def _param_args(params):
    return [params[k] for k in _PARAM_KEYS]


def _param_specs(params, grid_ndim):
    # Full-shape blocks with a constant block index: weights are fetched once and stay
    # VMEM-resident across the whole grid (single-buffering them via pl.Buffered(1) would
    # halve that footprint further on v7x; left default here for lowering safety).
    if grid_ndim == 1:
        idx = lambda i: (0, 0)
    else:
        idx = lambda c, i: (0, 0)
    return [pl.BlockSpec(params[k].shape, idx) for k in _PARAM_KEYS]


def _param_bytes(params):
    return sum(int(params[k].size) * params[k].dtype.itemsize for k in _PARAM_KEYS)


def _compiler_params(params, tb, d_in, out_size, out_pad, semantics):
    # Explicit VMEM budget: resident weights (double-buffered by default) + streamed
    # x / y / w / out tiles + f32/bf16 intermediates, with 2x margin; clamped to
    # [32 MiB, 64 MiB] so it is a raise over v5e's 16 MiB default and still legal on v7x.
    stream = tb * d_in * 2 + 2 * tb * out_size * 4 + tb * out_pad * 4
    interm = tb * 1024 * 6 * 2
    need = 2 * _param_bytes(params) + 2 * stream + interm
    vmem = int(min(64 << 20, max(32 << 20, 2 * need)))
    return pltpu.CompilerParams(dimension_semantics=semantics, vmem_limit_bytes=vmem)


def _cost_estimate(params, b_pad, d_in, out_size, out_pad):
    flops = 2 * b_pad * (d_in * 1024 + 1024 * 512 + 512 * 256 + 256 * out_pad)
    io = b_pad * d_in * 2 + 3 * b_pad * out_pad * 4
    return pl.CostEstimate(flops=int(flops), transcendentals=int(b_pad * out_pad),
                           bytes_accessed=int(_param_bytes(params) + io))


# ----------------------------- Pallas kernels ------------------------------ #

def _mlp_body(x_ref, w1, b1, w2, b2, w3, b3, w4, b4):
    """Fused MLP: bf16 matmuls on the MXU, f32 accumulate/bias/ReLU. Returns f32 logits."""
    h = x_ref[...]                                   # bf16 (cast in the wrapper)
    h = jnp.dot(h, w1[...], preferred_element_type=jnp.float32) + b1[...]
    h = jnp.maximum(h, 0.0).astype(jnp.bfloat16)
    h = jnp.dot(h, w2[...], preferred_element_type=jnp.float32) + b2[...]
    h = jnp.maximum(h, 0.0).astype(jnp.bfloat16)
    h = jnp.dot(h, w3[...], preferred_element_type=jnp.float32) + b3[...]
    h = jnp.maximum(h, 0.0).astype(jnp.bfloat16)
    return jnp.dot(h, w4[...], preferred_element_type=jnp.float32) + b4[...]


def _mlp_infer_kernel(x_ref, w1, b1, w2, b2, w3, b3, w4, b4, out_ref, *,
                      final_act, out_size):
    logits = _mlp_body(x_ref, w1, b1, w2, b2, w3, b3, w4, b4)
    out_pad = logits.shape[-1]
    if final_act == "softmax":
        if out_size < out_pad:
            col = jax.lax.broadcasted_iota(jnp.int32, logits.shape, 1)
            logits = jnp.where(col < out_size, logits, -1e30)   # mask padded lanes
        m = jnp.max(logits, axis=-1, keepdims=True)
        e = jnp.exp(logits - m)
        logits = e / jnp.sum(e, axis=-1, keepdims=True)          # exact divide
    elif final_act == "sigmoid":
        logits = 1.0 / (1.0 + jnp.exp(-logits))                  # exact divide
    out_ref[...] = logits   # lane-dense (tb, out_pad) store; wrapper slices valid cols


def _mlp_loss_kernel(x_ref, y_ref, wt_ref, w1, b1, w2, b2, w3, b3, w4, b4,
                     *out_refs, metric, out_size, eval_rating):
    """Fused MLP + loss reduction.

    Each output is a lane-dense (1, 8, out_pad) partial-sum block, VMEM-resident across the
    inner ("arbitrary") batch-tile axis, one block per value of the leading "parallel"
    (per-TensorCore) axis. The final scalar reduce happens in the JAX wrapper.
    """
    @pl.when(pl.program_id(1) == 0)
    def _init():
        for r in out_refs:
            r[...] = jnp.zeros_like(r)

    logits = _mlp_body(x_ref, w1, b1, w2, b2, w3, b3, w4, b4)     # (tb, out_pad) f32
    tb, out_pad = logits.shape
    pad_cols = out_pad - out_size

    y = y_ref[...]
    wt = wt_ref[...]
    if pad_cols:
        # Zero-extend labels/weights to the lane-dense logits width: pad lanes contribute
        # exactly 0 to every term below (the invariant the -1e30 softmax sentinel needs).
        y = jnp.pad(y, ((0, 0), (0, pad_cols)))
        wt = jnp.pad(wt, ((0, 0), (0, pad_cols)))

    def acc(ref, term):
        # Partial reduce over sublane groups only (plain VPU adds); lanes stay intact so
        # there is no per-step cross-lane reduce and no 1-lane masked store.
        ref[...] += jnp.sum(term.reshape(tb // 8, 8, out_pad), axis=0)[None]

    if eval_rating:
        # MSE of (+x, 0, -x) against (y, w) plus weights.sum(), all in one pass.
        lp_ref, l0_ref, ln_ref, ws_ref = out_refs
        dp = logits - y
        dn = logits + y
        acc(lp_ref, dp * dp * wt)
        acc(l0_ref, y * y * wt)
        acc(ln_ref, dn * dn * wt)
        acc(ws_ref, wt)
    else:
        loss_ref, ws_ref = out_refs
        if metric == "rating":
            d = logits - y
            acc(loss_ref, d * d * wt)
        elif metric in ("watch", "plantowatch"):
            x = logits
            if pad_cols:
                col = jax.lax.broadcasted_iota(jnp.int32, x.shape, 1)
                x = jnp.where(col < out_size, x, -1e30)   # exclude pad lanes from lse
            m = jnp.max(x, axis=-1, keepdims=True)
            lse = jnp.log(jnp.sum(jnp.exp(x - m), axis=-1, keepdims=True)) + m
            acc(loss_ref, -(x - lse) * y * wt)
        else:   # "drop": binary_cross_entropy_with_logits, reduction='sum', per-elem weight
            x = logits
            per = jnp.maximum(x, 0.0) - x * y + jnp.log(1.0 + jnp.exp(-jnp.abs(x)))
            acc(loss_ref, per * wt)
        acc(ws_ref, wt)


# ----------------------------- Pallas wrappers ------------------------------ #

def _run_mlp_infer(params, x, *, final_act, out_size, out_pad):
    b, d_in = x.shape
    tb = _batch_tile(b)
    b_pad = _round_up(b, tb)
    grid_n = b_pad // tb
    x_p = _pad2d(x, b_pad, d_in).astype(jnp.bfloat16)
    kernel = functools.partial(_mlp_infer_kernel, final_act=final_act, out_size=out_size)
    out = pl.pallas_call(
        kernel,
        out_shape=jax.ShapeDtypeStruct((b_pad, out_pad), jnp.float32),
        grid=(grid_n,),
        in_specs=[pl.BlockSpec((tb, d_in), lambda i: (i, 0))] + _param_specs(params, 1),
        out_specs=pl.BlockSpec((tb, out_pad), lambda i: (i, 0)),
        compiler_params=_compiler_params(params, tb, d_in, out_size, out_pad, ("parallel",)),
        cost_estimate=_cost_estimate(params, b_pad, d_in, out_size, out_pad),
    )(x_p, *_param_args(params))
    return out[:b, :out_size]


def _run_mlp_loss(params, x, labels, weights, *, metric, out_size, out_pad,
                  eval_rating=False):
    b, d_in = x.shape
    tb = _batch_tile(b)
    n_tiles = -(-b // tb)
    # Split the batch tiles across both TensorCores on v7x megacore via a leading
    # "parallel" axis with per-core partial output blocks; on single-TC chips the two
    # sub-ranges simply run sequentially.
    n_split = 2 if n_tiles >= 2 else 1
    inner = -(-n_tiles // n_split)
    b_pad = n_split * inner * tb

    # Zero-padded rows carry zero weight -> contribute nothing to any loss or wsum.
    x_p = _pad2d(x, b_pad, d_in).astype(jnp.bfloat16)   # bf16 stream: half the x DMA bytes
    y_p = _pad2d(labels, b_pad, out_size)                # native width: no 8x lane padding
    w_p = _pad2d(weights, b_pad, out_size)

    n_out = 4 if eval_rating else 2
    kernel = functools.partial(_mlp_loss_kernel, metric=metric, out_size=out_size,
                               eval_rating=eval_rating)
    part_shape = jax.ShapeDtypeStruct((n_split, 8, out_pad), jnp.float32)
    part_spec = pl.BlockSpec((1, 8, out_pad), lambda c, i: (c, 0, 0))
    tile_idx = lambda c, i: (c * inner + i, 0)

    outs = pl.pallas_call(
        kernel,
        out_shape=tuple(part_shape for _ in range(n_out)),
        grid=(n_split, inner),
        in_specs=[pl.BlockSpec((tb, d_in), tile_idx),
                  pl.BlockSpec((tb, out_size), tile_idx),
                  pl.BlockSpec((tb, out_size), tile_idx)] + _param_specs(params, 2),
        out_specs=tuple(part_spec for _ in range(n_out)),
        compiler_params=_compiler_params(params, tb, d_in, out_size, out_pad,
                                         ("parallel", "arbitrary")),
        cost_estimate=_cost_estimate(params, b_pad, d_in, out_size, out_pad),
    )(x_p, y_p, w_p, *_param_args(params))
    # Tiny epilogue: reduce each per-core (8, out_pad) partial block to a scalar.
    return tuple(jnp.sum(o) for o in outs)


# ------------------------------ Model class -------------------------------- #

class BagOfWordsModel:
    def __init__(self, input_sizes, output_index, metric, key):
        assert metric in ("rating", "watch", "plantowatch", "drop")
        self.input_sizes = input_sizes
        self.output_index = output_index
        self.metric = metric
        self.output_size = self.input_sizes[self.output_index]
        self.input_fields = 2
        self.out_pad = _round_up(self.output_size, 128)   # lane-dense final layer

        d_in = sum(self.input_sizes) * self.input_fields
        dims = [d_in, 1024, 512, 256, self.output_size]
        params = {}
        for i in range(4):
            key, k_w, k_b = jax.random.split(key, 3)
            bound = 1.0 / float(dims[i]) ** 0.5
            w = jax.random.uniform(k_w, (dims[i], dims[i + 1]), jnp.float32, -bound, bound)
            b = jax.random.uniform(k_b, (1, dims[i + 1]), jnp.float32, -bound, bound)
            if i == 3 and self.out_pad != self.output_size:
                w = jnp.pad(w, ((0, 0), (0, self.out_pad - self.output_size)))
                b = jnp.pad(b, ((0, 0), (0, self.out_pad - self.output_size)))
            # bf16 weights halve HBM/VMEM traffic and use the MXU's native bf16 path;
            # biases stay f32 (added to the f32 accumulator).
            params[f"w{i + 1}"] = w.astype(jnp.bfloat16)
            params[f"b{i + 1}"] = b
        self.params = params

    def model(self, inputs, final_act="none"):
        return _run_mlp_infer(self.params, inputs, final_act=final_act,
                              out_size=self.output_size, out_pad=self.out_pad)

    def _loss(self, inputs, labels, weights, eval_rating=False):
        return _run_mlp_loss(self.params, inputs, labels, weights,
                             metric=self.metric, out_size=self.output_size,
                             out_pad=self.out_pad, eval_rating=eval_rating)

    def forward(self, inputs, labels, weights, mask, mode, mask_key=None):
        if mask:
            # TODO(synk): fuse this mask into the loss kernel with pltpu.prng_random_bits
            # to avoid the extra HBM pass over inputs/weights.
            keys = jax.random.split(mask_key, len(self.input_sizes))
            masks = [jax.random.uniform(k, (inputs.shape[0], s)) > mask
                     for k, s in zip(keys, self.input_sizes)]
            input_mask = jnp.concatenate([masks[0], masks[1]] * self.input_fields, axis=1)
            output_mask = jnp.logical_not(masks[self.output_index])
            inputs = inputs * input_mask
            weights = weights * output_mask

        if mode == "training":
            loss, wsum = self._loss(inputs, labels, weights)
            return loss, wsum
        elif mode == "evaluation":
            if self.metric == "rating":
                l_pos, l_zero, l_neg, wsum = self._loss(inputs, labels, weights,
                                                        eval_rating=True)
                return (l_pos, l_zero, l_neg), wsum
            elif self.metric in ("watch", "plantowatch", "drop"):
                loss, wsum = self._loss(inputs, labels, weights)
                return loss, wsum
        elif mode == "inference":
            assert not mask
            if self.metric in ("watch", "plantowatch"):
                return self.model(inputs, final_act="softmax")
            elif self.metric == "drop":
                return self.model(inputs, final_act="sigmoid")
            return self.model(inputs, final_act="none")
        else:
            assert False


# --------------------------------- Main ------------------------------------ #

def _ref_logits(params, x, out_size):
    """Plain-JAX reference mirroring the kernel's bf16-weight / f32-accumulate numerics."""
    h = x.astype(jnp.bfloat16)
    for i in range(1, 5):
        h = jnp.dot(h, params[f"w{i}"], preferred_element_type=jnp.float32) + params[f"b{i}"]
        if i < 4:
            h = jnp.maximum(h, 0.0).astype(jnp.bfloat16)
    return h[:, :out_size]


def _close(a, b, rtol=2e-2, atol=1e-3):
    return bool(jnp.abs(a - b) <= atol + rtol * jnp.abs(b))


if __name__ == "__main__":
    key = jax.random.PRNGKey(0)
    k_param, k_x, k_y, k_w = jax.random.split(key, 4)

    input_sizes = (16, 8)
    output_index = 0
    batch = 4

    # rating metric: fused MSE training loss + single-pass 3-way evaluation
    model = BagOfWordsModel(input_sizes, output_index, "rating", k_param)
    d_in = sum(input_sizes) * model.input_fields  # 48

    inputs = jax.random.uniform(k_x, (batch, d_in), jnp.float32)
    labels = jax.random.uniform(k_y, (batch, model.output_size), jnp.float32)
    weights = jax.random.uniform(k_w, (batch, model.output_size), jnp.float32)

    loss, wsum = model.forward(inputs, labels, weights, mask=0, mode="training")
    (l1, l0, lm1), wsum_eval = model.forward(inputs, labels, weights, mask=0,
                                             mode="evaluation")
    preds = model.forward(inputs, labels, weights, mask=0, mode="inference")

    # watch metric: fused weighted soft-label cross-entropy + softmax inference
    model_ce = BagOfWordsModel(input_sizes, output_index, "watch", k_param)
    ce_loss, ce_wsum = model_ce.forward(inputs, labels, weights, mask=0, mode="training")
    probs = model_ce.forward(inputs, labels, weights, mask=0, mode="inference")

    # drop metric: fused BCE-with-logits + sigmoid inference
    model_bce = BagOfWordsModel(input_sizes, output_index, "drop", k_param)
    bce_loss, bce_wsum = model_bce.forward(inputs, labels, weights, mask=0, mode="training")
    sig = model_bce.forward(inputs, labels, weights, mask=0, mode="inference")

    # larger batch exercises the multi-tile, dual-axis (per-core split) loss grid
    kb_x, kb_y, kb_w = jax.random.split(jax.random.PRNGKey(1), 3)
    big = 1200
    inputs_b = jax.random.uniform(kb_x, (big, d_in), jnp.float32)
    labels_b = jax.random.uniform(kb_y, (big, model.output_size), jnp.float32)
    weights_b = jax.random.uniform(kb_w, (big, model.output_size), jnp.float32)
    loss_b, wsum_b = model.forward(inputs_b, labels_b, weights_b, mask=0, mode="training")
    (bl1, bl0, blm1), bwsum = model.forward(inputs_b, labels_b, weights_b, mask=0,
                                            mode="evaluation")
    preds_b = model.forward(inputs_b, labels_b, weights_b, mask=0, mode="inference")

    jax.block_until_ready((loss, wsum, l1, l0, lm1, wsum_eval, preds,
                           ce_loss, ce_wsum, probs, bce_loss, bce_wsum, sig,
                           loss_b, wsum_b, bl1, bl0, blm1, bwsum, preds_b))

    assert preds.shape == (batch, model.output_size)
    assert probs.shape == (batch, model.output_size)
    assert sig.shape == (batch, model.output_size)
    assert preds_b.shape == (big, model.output_size)
    assert bool(jnp.isfinite(loss)) and bool(jnp.isfinite(wsum))
    assert bool(jnp.isfinite(ce_loss)) and bool(jnp.isfinite(bce_loss))
    assert bool(jnp.isfinite(loss_b)) and bool(jnp.isfinite(bl1))

    # consistency checks against a plain-JAX reference with the same bf16 params
    ref_small = jnp.sum(jnp.square(_ref_logits(model.params, inputs, model.output_size)
                                   - labels) * weights)
    ref_big = jnp.sum(jnp.square(_ref_logits(model.params, inputs_b, model.output_size)
                                 - labels_b) * weights_b)
    assert _close(loss, ref_small)
    assert _close(loss_b, ref_big)
    assert _close(wsum, jnp.sum(weights), rtol=1e-3)
    assert _close(wsum_b, jnp.sum(weights_b), rtol=1e-3)
    assert _close(l0, jnp.sum(labels * labels * weights))

    print("KERNEL_OK")
</pallas_src>

<mosaic_0001>
module attributes {stable_mosaic.version = 11 : i64} {
  func.func @_mlp_loss_kernel(%arg0: i32, %arg1: i32, %arg2: memref<16x48xbf16, #tpu.memory_space<vmem>>, %arg3: memref<16x16xf32, #tpu.memory_space<vmem>>, %arg4: memref<16x16xf32, #tpu.memory_space<vmem>>, %arg5: memref<48x1024xbf16, #tpu.memory_space<vmem>>, %arg6: memref<1x1024xf32, #tpu.memory_space<vmem>>, %arg7: memref<1024x512xbf16, #tpu.memory_space<vmem>>, %arg8: memref<1x512xf32, #tpu.memory_space<vmem>>, %arg9: memref<512x256xbf16, #tpu.memory_space<vmem>>, %arg10: memref<1x256xf32, #tpu.memory_space<vmem>>, %arg11: memref<256x128xbf16, #tpu.memory_space<vmem>>, %arg12: memref<1x128xf32, #tpu.memory_space<vmem>>, %arg13: memref<1x8x128xf32, #tpu.memory_space<vmem>>, %arg14: memref<1x8x128xf32, #tpu.memory_space<vmem>>) attributes {dimension_semantics = [#tpu.dimension_semantics<parallel>, #tpu.dimension_semantics<arbitrary>], iteration_bounds = array<i64: 1, 1>, scalar_prefetch = 0 : i64, scratch_operands = 0 : i64, tpu.core_type = #tpu.core_type<tc>, window_params = [{transform_indices = @transform_0, window_bounds = array<i64: 16, 48>}, {transform_indices = @transform_1, window_bounds = array<i64: 16, 16>}, {transform_indices = @transform_2, window_bounds = array<i64: 16, 16>}, {pipeline_mode = #tpu.pipeline_mode<synchronous>, transform_indices = @transform_3, window_bounds = array<i64: 48, 1024>}, {pipeline_mode = #tpu.pipeline_mode<synchronous>, transform_indices = @transform_4, window_bounds = array<i64: 1, 1024>}, {pipeline_mode = #tpu.pipeline_mode<synchronous>, transform_indices = @transform_5, window_bounds = array<i64: 1024, 512>}, {pipeline_mode = #tpu.pipeline_mode<synchronous>, transform_indices = @transform_6, window_bounds = array<i64: 1, 512>}, {pipeline_mode = #tpu.pipeline_mode<synchronous>, transform_indices = @transform_7, window_bounds = array<i64: 512, 256>}, {pipeline_mode = #tpu.pipeline_mode<synchronous>, transform_indices = @transform_8, window_bounds = array<i64: 1, 256>}, {pipeline_mode = #tpu.pipeline_mode<synchronous>, transform_indices = @transform_9, window_bounds = array<i64: 256, 128>}, {pipeline_mode = #tpu.pipeline_mode<synchronous>, transform_indices = @transform_10, window_bounds = array<i64: 1, 128>}, {transform_indices = @transform_11, window_bounds = array<i64: 1, 8, 128>}, {transform_indices = @transform_12, window_bounds = array<i64: 1, 8, 128>}]} {
    %c0_i32 = arith.constant 0 : i32
    %0 = arith.cmpi eq, %arg1, %c0_i32 : i32
    %1 = arith.extui %0 : i1 to i32
    %c0_i32_0 = arith.constant 0 : i32
    %2 = arith.cmpi ne, %1, %c0_i32_0 : i32
    scf.if %2 {
      %cst_44 = arith.constant 0.000000e+00 : f32
      %56 = vector.broadcast %cst_44 : f32 to vector<1x8x128xf32>
      %c0_45 = arith.constant 0 : index
      %c0_46 = arith.constant 0 : index
      %c0_47 = arith.constant 0 : index
      %57 = vector.load %arg13[%c0_45, %c0_46, %c0_47] : memref<1x8x128xf32, #tpu.memory_space<vmem>>, vector<1x8x128xf32>
      tpu.vector_store %arg13[%c0_45, %c0_46, %c0_47], %56 {strides = array<i32>} : memref<1x8x128xf32, #tpu.memory_space<vmem>>, vector<1x8x128xf32>,
      %cst_48 = arith.constant 0.000000e+00 : f32
      %58 = vector.broadcast %cst_48 : f32 to vector<1x8x128xf32>
      %c0_49 = arith.constant 0 : index
      %c0_50 = arith.constant 0 : index
      %c0_51 = arith.constant 0 : index
      %59 = vector.load %arg14[%c0_49, %c0_50, %c0_51] : memref<1x8x128xf32, #tpu.memory_space<vmem>>, vector<1x8x128xf32>
      tpu.vector_store %arg14[%c0_49, %c0_50, %c0_51], %58 {strides = array<i32>} : memref<1x8x128xf32, #tpu.memory_space<vmem>>, vector<1x8x128xf32>,
    } else {
    }
    %c0 = arith.constant 0 : index
    %c0_1 = arith.constant 0 : index
    %3 = vector.load %arg2[%c0, %c0_1] : memref<16x48xbf16, #tpu.memory_space<vmem>>, vector<16x48xbf16>
    %c0_2 = arith.constant 0 : index
    %c0_3 = arith.constant 0 : index
    %4 = vector.load %arg5[%c0_2, %c0_3] : memref<48x1024xbf16, #tpu.memory_space<vmem>>, vector<48x1024xbf16>
    %cst = arith.constant dense<0.000000e+00> : vector<16x1024xf32>
    %5 = tpu.matmul %3, %4, %cst {dimension_numbers = #tpu.dot_dimension_numbers<[1], [0], [0], [1], [0, 0, 1, 1], [], []>} : vector<16x48xbf16>, vector<48x1024xbf16>, vector<16x1024xf32> -> vector<16x1024xf32>
    %c0_4 = arith.constant 0 : index
    %c0_5 = arith.constant 0 : index
    %6 = vector.load %arg6[%c0_4, %c0_5] : memref<1x1024xf32, #tpu.memory_space<vmem>>, vector<1x1024xf32>
    %7 = vector.broadcast %6 : vector<1x1024xf32> to vector<16x1024xf32>
    %8 = arith.addf %5, %7 : vector<16x1024xf32>
    %cst_6 = arith.constant 0.000000e+00 : f32
    %9 = vector.broadcast %cst_6 : f32 to vector<16x1024xf32>
    %10 = arith.maximumf %8, %9 : vector<16x1024xf32>
    %11 = arith.truncf %10 : vector<16x1024xf32> to vector<16x1024xbf16>
    %c0_7 = arith.constant 0 : index
    %c0_8 = arith.constant 0 : index
    %12 = vector.load %arg7[%c0_7, %c0_8] : memref<1024x512xbf16, #tpu.memory_space<vmem>>, vector<1024x512xbf16>
    %cst_9 = arith.constant dense<0.000000e+00> : vector<16x512xf32>
    %13 = tpu.matmul %11, %12, %cst_9 {dimension_numbers = #tpu.dot_dimension_numbers<[1], [0], [0], [1], [0, 0, 1, 1], [], []>} : vector<16x1024xbf16>, vector<1024x512xbf16>, vector<16x512xf32> -> vector<16x512xf32>
    %c0_10 = arith.constant 0 : index
    %c0_11 = arith.constant 0 : index
    %14 = vector.load %arg8[%c0_10, %c0_11] : memref<1x512xf32, #tpu.memory_space<vmem>>, vector<1x512xf32>
    %15 = vector.broadcast %14 : vector<1x512xf32> to vector<16x512xf32>
    %16 = arith.addf %13, %15 : vector<16x512xf32>
    %cst_12 = arith.constant 0.000000e+00 : f32
    %17 = vector.broadcast %cst_12 : f32 to vector<16x512xf32>
    %18 = arith.maximumf %16, %17 : vector<16x512xf32>
    %19 = arith.truncf %18 : vector<16x512xf32> to vector<16x512xbf16>
    %c0_13 = arith.constant 0 : index
    %c0_14 = arith.constant 0 : index
    %20 = vector.load %arg9[%c0_13, %c0_14] : memref<512x256xbf16, #tpu.memory_space<vmem>>, vector<512x256xbf16>
    %cst_15 = arith.constant dense<0.000000e+00> : vector<16x256xf32>
    %21 = tpu.matmul %19, %20, %cst_15 {dimension_numbers = #tpu.dot_dimension_numbers<[1], [0], [0], [1], [0, 0, 1, 1], [], []>} : vector<16x512xbf16>, vector<512x256xbf16>, vector<16x256xf32> -> vector<16x256xf32>
    %c0_16 = arith.constant 0 : index
    %c0_17 = arith.constant 0 : index
    %22 = vector.load %arg10[%c0_16, %c0_17] : memref<1x256xf32, #tpu.memory_space<vmem>>, vector<1x256xf32>
    %23 = vector.broadcast %22 : vector<1x256xf32> to vector<16x256xf32>
    %24 = arith.addf %21, %23 : vector<16x256xf32>
    %cst_18 = arith.constant 0.000000e+00 : f32
    %25 = vector.broadcast %cst_18 : f32 to vector<16x256xf32>
    %26 = arith.maximumf %24, %25 : vector<16x256xf32>
    %27 = arith.truncf %26 : vector<16x256xf32> to vector<16x256xbf16>
    %c0_19 = arith.constant 0 : index
    %c0_20 = arith.constant 0 : index
    %28 = vector.load %arg11[%c0_19, %c0_20] : memref<256x128xbf16, #tpu.memory_space<vmem>>, vector<256x128xbf16>
    %cst_21 = arith.constant dense<0.000000e+00> : vector<16x128xf32>
    %29 = tpu.matmul %27, %28, %cst_21 {dimension_numbers = #tpu.dot_dimension_numbers<[1], [0], [0], [1], [0, 0, 1, 1], [], []>} : vector<16x256xbf16>, vector<256x128xbf16>, vector<16x128xf32> -> vector<16x128xf32>
    %c0_22 = arith.constant 0 : index
    %c0_23 = arith.constant 0 : index
    %30 = vector.load %arg12[%c0_22, %c0_23] : memref<1x128xf32, #tpu.memory_space<vmem>>, vector<1x128xf32>
    %31 = vector.broadcast %30 : vector<1x128xf32> to vector<16x128xf32>
    %32 = arith.addf %29, %31 : vector<16x128xf32>
    %c0_24 = arith.constant 0 : index
    %c0_25 = arith.constant 0 : index
    %33 = vector.load %arg3[%c0_24, %c0_25] : memref<16x16xf32, #tpu.memory_space<vmem>>, vector<16x16xf32>
    %c0_26 = arith.constant 0 : index
    %c0_27 = arith.constant 0 : index
    %34 = vector.load %arg4[%c0_26, %c0_27] : memref<16x16xf32, #tpu.memory_space<vmem>>, vector<16x16xf32>
    %c0_i32_28 = arith.constant 0 : i32
    %35 = arith.sitofp %c0_i32_28 : i32 to f32
    %36 = vector.broadcast %35 : f32 to vector<16x112xf32>
    %37 = tpu.concatenate %33, %36 in 1 : vector<16x16xf32>, vector<16x112xf32> -> vector<16x128xf32>
    %c0_i32_29 = arith.constant 0 : i32
    %38 = arith.sitofp %c0_i32_29 : i32 to f32
    %39 = vector.broadcast %38 : f32 to vector<16x112xf32>
    %40 = tpu.concatenate %34, %39 in 1 : vector<16x16xf32>, vector<16x112xf32> -> vector<16x128xf32>
    %41 = arith.subf %32, %37 : vector<16x128xf32>
    %42 = arith.mulf %41, %41 : vector<16x128xf32>
    %43 = arith.mulf %42, %40 : vector<16x128xf32>
    %c0_30 = arith.constant 0 : index
    %c0_31 = arith.constant 0 : index
    %c0_32 = arith.constant 0 : index
    %44 = vector.load %arg13[%c0_30, %c0_31, %c0_32] : memref<1x8x128xf32, #tpu.memory_space<vmem>>, vector<1x8x128xf32>
    %45 = vector.shape_cast %43 : vector<16x128xf32> to vector<2x8x128xf32>
    %cst_33 = arith.constant dense<0.000000e+00> : vector<8x128xf32>
    %46 = vector.multi_reduction <add>, %45, %cst_33 [0] : vector<2x8x128xf32> to vector<8x128xf32>
    %47 = vector.shape_cast %46 : vector<8x128xf32> to vector<1x8x128xf32>
    %48 = arith.addf %44, %47 : vector<1x8x128xf32>
    %c0_34 = arith.constant 0 : index
    %c0_35 = arith.constant 0 : index
    %c0_36 = arith.constant 0 : index
    %49 = vector.load %arg13[%c0_34, %c0_35, %c0_36] : memref<1x8x128xf32, #tpu.memory_space<vmem>>, vector<1x8x128xf32>
    tpu.vector_store %arg13[%c0_34, %c0_35, %c0_36], %48 {strides = array<i32>} : memref<1x8x128xf32, #tpu.memory_space<vmem>>, vector<1x8x128xf32>,
    %c0_37 = arith.constant 0 : index
    %c0_38 = arith.constant 0 : index
    %c0_39 = arith.constant 0 : index
    %50 = vector.load %arg14[%c0_37, %c0_38, %c0_39] : memref<1x8x128xf32, #tpu.memory_space<vmem>>, vector<1x8x128xf32>
    %51 = vector.shape_cast %40 : vector<16x128xf32> to vector<2x8x128xf32>
    %cst_40 = arith.constant dense<0.000000e+00> : vector<8x128xf32>
    %52 = vector.multi_reduction <add>, %51, %cst_40 [0] : vector<2x8x128xf32> to vector<8x128xf32>
    %53 = vector.shape_cast %52 : vector<8x128xf32> to vector<1x8x128xf32>
    %54 = arith.addf %50, %53 : vector<1x8x128xf32>
    %c0_41 = arith.constant 0 : index
    %c0_42 = arith.constant 0 : index
    %c0_43 = arith.constant 0 : index
    %55 = vector.load %arg14[%c0_41, %c0_42, %c0_43] : memref<1x8x128xf32, #tpu.memory_space<vmem>>, vector<1x8x128xf32>
    tpu.vector_store %arg14[%c0_41, %c0_42, %c0_43], %54 {strides = array<i32>} : memref<1x8x128xf32, #tpu.memory_space<vmem>>, vector<1x8x128xf32>,
    return
  }
  func.func @transform_0(%arg0: i32, %arg1: i32) -> (i32, i32) {
    %c1_i32 = arith.constant 1 : i32
    %0 = arith.muli %arg0, %c1_i32 : i32
    %1 = arith.addi %0, %arg1 : i32
    %c0_i32 = arith.constant 0 : i32
    %c0_i32_0 = arith.constant 0 : i32
    return %1, %c0_i32 : i32, i32
  }
  func.func @transform_1(%arg0: i32, %arg1: i32) -> (i32, i32) {
    %c1_i32 = arith.constant 1 : i32
    %0 = arith.muli %arg0, %c1_i32 : i32
    %1 = arith.addi %0, %arg1 : i32
    %c0_i32 = arith.constant 0 : i32
    %c0_i32_0 = arith.constant 0 : i32
    return %1, %c0_i32 : i32, i32
  }
  func.func @transform_2(%arg0: i32, %arg1: i32) -> (i32, i32) {
    %c1_i32 = arith.constant 1 : i32
    %0 = arith.muli %arg0, %c1_i32 : i32
    %1 = arith.addi %0, %arg1 : i32
    %c0_i32 = arith.constant 0 : i32
    %c0_i32_0 = arith.constant 0 : i32
    return %1, %c0_i32 : i32, i32
  }
  func.func @transform_3(%arg0: i32, %arg1: i32) -> (i32, i32) {
    %c0_i32 = arith.constant 0 : i32
    %c0_i32_0 = arith.constant 0 : i32
    %c0_i32_1 = arith.constant 0 : i32
    return %c0_i32, %c0_i32_0 : i32, i32
  }
  func.func @transform_4(%arg0: i32, %arg1: i32) -> (i32, i32) {
    %c0_i32 = arith.constant 0 : i32
    %c0_i32_0 = arith.constant 0 : i32
    %c0_i32_1 = arith.constant 0 : i32
    return %c0_i32, %c0_i32_0 : i32, i32
  }
  func.func @transform_5(%arg0: i32, %arg1: i32) -> (i32, i32) {
    %c0_i32 = arith.constant 0 : i32
    %c0_i32_0 = arith.constant 0 : i32
    %c0_i32_1 = arith.constant 0 : i32
    return %c0_i32, %c0_i32_0 : i32, i32
  }
  func.func @transform_6(%arg0: i32, %arg1: i32) -> (i32, i32) {
    %c0_i32 = arith.constant 0 : i32
    %c0_i32_0 = arith.constant 0 : i32
    %c0_i32_1 = arith.constant 0 : i32
    return %c0_i32, %c0_i32_0 : i32, i32
  }
  func.func @transform_7(%arg0: i32, %arg1: i32) -> (i32, i32) {
    %c0_i32 = arith.constant 0 : i32
    %c0_i32_0 = arith.constant 0 : i32
    %c0_i32_1 = arith.constant 0 : i32
    return %c0_i32, %c0_i32_0 : i32, i32
  }
  func.func @transform_8(%arg0: i32, %arg1: i32) -> (i32, i32) {
    %c0_i32 = arith.constant 0 : i32
    %c0_i32_0 = arith.constant 0 : i32
    %c0_i32_1 = arith.constant 0 : i32
    return %c0_i32, %c0_i32_0 : i32, i32
  }
  func.func @transform_9(%arg0: i32, %arg1: i32) -> (i32, i32) {
    %c0_i32 = arith.constant 0 : i32
    %c0_i32_0 = arith.constant 0 : i32
    %c0_i32_1 = arith.constant 0 : i32
    return %c0_i32, %c0_i32_0 : i32, i32
  }
  func.func @transform_10(%arg0: i32, %arg1: i32) -> (i32, i32) {
    %c0_i32 = arith.constant 0 : i32
    %c0_i32_0 = arith.constant 0 : i32
    %c0_i32_1 = arith.constant 0 : i32
    return %c0_i32, %c0_i32_0 : i32, i32
  }
  func.func @transform_11(%arg0: i32, %arg1: i32) -> (i32, i32, i32) {
    %c0_i32 = arith.constant 0 : i32
    %c0_i32_0 = arith.constant 0 : i32
    %c0_i32_1 = arith.constant 0 : i32
    return %arg0, %c0_i32, %c0_i32_0 : i32, i32, i32
  }
  func.func @transform_12(%arg0: i32, %arg1: i32) -> (i32, i32, i32) {
    %c0_i32 = arith.constant 0 : i32
    %c0_i32_0 = arith.constant 0 : i32
    %c0_i32_1 = arith.constant 0 : i32
    return %arg0, %c0_i32, %c0_i32_0 : i32, i32, i32
  }
}

</mosaic_0001>

<llo_original>
// kernel: tpu_custom_call.1
$region0: #{tpu_custom_call.1}
  #allocation0 [shape = 'u32[]', space=smem, size = 0x4, offset = 0x4, fixed_abs, tag = 'smem constant byte address 0x4 - core index']
  #allocation1 [shape = 'u32[144,128]{1,0:T(1,128)}', space=vmem, size = 0x12000, scoped, tag = 'internal scratch']
  %s0 = inlined_call_operand.hbm [shape: bf16[16,48], index: 0, kind: input, shape index: {}]
  %s1 = inlined_call_operand.hbm [shape: f32[16,16], index: 1, kind: input, shape index: {}]
  %s2 = inlined_call_operand.hbm [shape: f32[16,16], index: 2, kind: input, shape index: {}]
  %s3 = inlined_call_operand.hbm [shape: bf16[48,1024], index: 3, kind: input, shape index: {}]
  %s4 = inlined_call_operand.vmem [shape: f32[1,1024], index: 4, kind: input, shape index: {}]
  %s5 = inlined_call_operand.hbm [shape: bf16[1024,512], index: 5, kind: input, shape index: {}]
  %s6 = inlined_call_operand.vmem [shape: f32[1,512], index: 6, kind: input, shape index: {}]
  %s7 = inlined_call_operand.hbm [shape: bf16[512,256], index: 7, kind: input, shape index: {}]
  %s8 = inlined_call_operand.vmem [shape: f32[1,256], index: 8, kind: input, shape index: {}]
  %s9 = inlined_call_operand.hbm [shape: bf16[256,128], index: 9, kind: input, shape index: {}]
  %s10 = inlined_call_operand.vmem [shape: f32[1,128], index: 10, kind: input, shape index: {}]
  %s11 = inlined_call_operand.hbm [shape: f32[1,8,128], index: 11, kind: output, shape index: {0}]
  %s12 = inlined_call_operand.hbm [shape: f32[1,8,128], index: 12, kind: output, shape index: {1}]
  %13 = xla_tuple %s11, %s12
  %s14 = sld [smem:[#allocation0]]
  $region94: #{tpu_custom_call.1} parent=0
    _
  %s16 = ssub.s32 1, %s14
  %s17 = scalar_select 0, %s16, %s14
  $region1: #{tpu_custom_call.1} parent=0
    #allocation2 [shape = 'u8[4096]{0}', space=vmem, size = 0x1000, scoped, tag = 'input window, operand 0, single buffered']
    #allocation3 [shape = 's32[1]{0}', space=sflag, size = 0x4, scoped, tag = 'scoped memory for tpu_custom_call.1']
    #allocation4 [shape = 's32[1]{0}', space=sflag, size = 0x4, scoped, tag = 'scoped memory for tpu_custom_call.1']
    #allocation5 [shape = 'u8[8192]{0}', space=vmem, size = 0x2000, scoped, tag = 'input window, operand 1, single buffered']
    #allocation6 [shape = 's32[1]{0}', space=sflag, size = 0x4, scoped, tag = 'scoped memory for tpu_custom_call.1']
    #allocation7 [shape = 'u8[8192]{0}', space=vmem, size = 0x2000, scoped, tag = 'input window, operand 2, single buffered']
    #allocation8 [shape = 'u8[98304]{0}', space=vmem, size = 0x18000, scoped, tag = 'input window, operand 3, single buffered']
    #allocation9 [shape = 's32[1]{0}', space=sflag, size = 0x4, scoped, tag = 'scoped memory for tpu_custom_call.1']
    #allocation10 [shape = 'u8[1048576]{0}', space=vmem, size = 0x100000, scoped, tag = 'input window, operand 5, single buffered']
    #allocation11 [shape = 'u8[262144]{0}', space=vmem, size = 0x40000, scoped, tag = 'input window, operand 7, single buffered']
    #allocation12 [shape = 's32[1]{0}', space=sflag, size = 0x4, scoped, tag = 'scoped memory for tpu_custom_call.1']
    #allocation13 [shape = 'u8[65536]{0}', space=vmem, size = 0x10000, scoped, tag = 'input window, operand 9, single buffered']
    #allocation14 [shape = 'u8[4096]{0}', space=vmem, size = 0x1000, scoped, tag = 'output window, operand 0, single buffered']
    #allocation15 [shape = 'u8[4096]{0}', space=vmem, size = 0x1000, scoped, tag = 'output window, operand 1, single buffered']
    #allocation16 [shape = 's32[1]{0}', space=sflag, size = 0x4, scoped, tag = 'scoped memory for tpu_custom_call.1']
    %18 = vsyncpa [#allocation3], 0
    %19 = vsyncpa [#allocation6], 0
    %20 = vsyncpa [#allocation9], 0
    %21 = vsyncpa [#allocation12], 0
    %22 = vsyncpa [#allocation4], 0
    %23 = vsyncpa [#allocation16], 0
    // Predicated region
    $region2: #{tpu_custom_call.1} parent=1 // pred_check
      _
    $region3: #{tpu_custom_call.1} parent=1 // pred_check_branch
      %25 = sbr.rel (0) target = $region5
    $region4: #{tpu_custom_call.1} parent=1 // pred_region
      %s26 = sadd.s32 0, 0
      %s27 = smul.u32 2, %s26
      %s29 = ssub.s32 128, 128
      %30 = vsyncadd [#allocation3], %s29
      %s31 = smul.addr %s27, 64
      %s32 = scalar_lea.hbm %s0, %s31
      %s33 = sshll.u32 [#allocation2], 4
      %s34 = int_to_ptr.vmem [resolvable:$true] %s33
      %39 = dma.hbm_to_vmem [thread:$0]  %s32, 128, %s34, [#allocation3], 64, 64, 4
    $region5: #{tpu_custom_call.1} parent=1 // pred_fallthru
      _
    // Predicated region
    $region6: #{tpu_custom_call.1} parent=1 // pred_check
      _
    $region7: #{tpu_custom_call.1} parent=1 // pred_check_branch
      %41 = sbr.rel (0) target = $region9
    $region8: #{tpu_custom_call.1} parent=1 // pred_region
      %s42 = sadd.s32 0, 0
      %s43 = smul.u32 2, %s42
      %s45 = ssub.s32 256, 256
      %46 = vsyncadd [#allocation6], %s45
      %s47 = smul.addr %s43, 128
      %s48 = scalar_lea.hbm %s1, %s47
      %s49 = sshll.u32 [#allocation5], 4
      %s50 = int_to_ptr.vmem [resolvable:$true] %s49
      %55 = dma.hbm_to_vmem [thread:$0]  %s48, 256, %s50, [#allocation6], 128, 128, 8
    $region9: #{tpu_custom_call.1} parent=1 // pred_fallthru
      _
    // Predicated region
    $region10: #{tpu_custom_call.1} parent=1 // pred_check
      _
    $region11: #{tpu_custom_call.1} parent=1 // pred_check_branch
      %57 = sbr.rel (0) target = $region13
    $region12: #{tpu_custom_call.1} parent=1 // pred_region
      %s58 = sadd.s32 0, 0
      %s59 = smul.u32 2, %s58
      %s61 = ssub.s32 256, 256
      %62 = vsyncadd [#allocation6], %s61
      %s63 = smul.addr %s59, 128
      %s64 = scalar_lea.hbm %s2, %s63
      %s65 = sshll.u32 [#allocation7], 4
      %s66 = int_to_ptr.vmem [resolvable:$true] %s65
      %71 = dma.hbm_to_vmem [thread:$0]  %s64, 256, %s66, [#allocation6], 128, 128, 8
    $region13: #{tpu_custom_call.1} parent=1 // pred_fallthru
      _
    // Predicated region
    $region14: #{tpu_custom_call.1} parent=1 // pred_check
      _
    $region15: #{tpu_custom_call.1} parent=1 // pred_check_branch
      %73 = sbr.rel (0) target = $region17
    $region16: #{tpu_custom_call.1} parent=1 // pred_region
      %s75 = ssub.s32 3072, 3072
      %76 = vsyncadd [#allocation9], %s75
      %s77 = sshll.u32 [#allocation8], 4
      %s78 = int_to_ptr.vmem [resolvable:$true] %s77
      %83 = dma.hbm_to_vmem [thread:$0]  %s3, 3072, %s78, [#allocation9], 512, 512, 32
    $region17: #{tpu_custom_call.1} parent=1 // pred_fallthru
      _
    // Predicated region
    $region18: #{tpu_custom_call.1} parent=1 // pred_check
      _
    $region19: #{tpu_custom_call.1} parent=1 // pred_check_branch
      %85 = sbr.rel (0) target = $region21
    $region20: #{tpu_custom_call.1} parent=1 // pred_region
      _
    $region21: #{tpu_custom_call.1} parent=1 // pred_fallthru
      _
    // Predicated region
    $region22: #{tpu_custom_call.1} parent=1 // pred_check
      _
    $region23: #{tpu_custom_call.1} parent=1 // pred_check_branch
      %87 = sbr.rel (0) target = $region25
    $region24: #{tpu_custom_call.1} parent=1 // pred_region
      %s89 = ssub.s32 32768, 32768
      %90 = vsyncadd [#allocation9], %s89
      %s91 = sshll.u32 [#allocation10], 4
      %s92 = int_to_ptr.vmem [resolvable:$true] %s91
      %97 = dma.hbm_to_vmem [thread:$0]  %s5, 32768, %s92, [#allocation9], 256, 256, 16
    $region25: #{tpu_custom_call.1} parent=1 // pred_fallthru
      _
    // Predicated region
    $region26: #{tpu_custom_call.1} parent=1 // pred_check
      _
    $region27: #{tpu_custom_call.1} parent=1 // pred_check_branch
      %99 = sbr.rel (0) target = $region29
    $region28: #{tpu_custom_call.1} parent=1 // pred_region
      _
    $region29: #{tpu_custom_call.1} parent=1 // pred_fallthru
      _
    // Predicated region
    $region30: #{tpu_custom_call.1} parent=1 // pred_check
      _
    $region31: #{tpu_custom_call.1} parent=1 // pred_check_branch
      %101 = sbr.rel (0) target = $region33
    $region32: #{tpu_custom_call.1} parent=1 // pred_region
      %s103 = ssub.s32 8192, 8192
      %104 = vsyncadd [#allocation12], %s103
      %s105 = sshll.u32 [#allocation11], 4
      %s106 = int_to_ptr.vmem [resolvable:$true] %s105
      %111 = dma.hbm_to_vmem [thread:$0]  %s7, 8192, %s106, [#allocation12], 128, 128, 8
    $region33: #{tpu_custom_call.1} parent=1 // pred_fallthru
      _
    // Predicated region
    $region34: #{tpu_custom_call.1} parent=1 // pred_check
      _
    $region35: #{tpu_custom_call.1} parent=1 // pred_check_branch
      %113 = sbr.rel (0) target = $region37
    $region36: #{tpu_custom_call.1} parent=1 // pred_region
      _
    $region37: #{tpu_custom_call.1} parent=1 // pred_fallthru
      _
    // Predicated region
    $region38: #{tpu_custom_call.1} parent=1 // pred_check
      _
    $region39: #{tpu_custom_call.1} parent=1 // pred_check_branch
      %115 = sbr.rel (0) target = $region41
    $region40: #{tpu_custom_call.1} parent=1 // pred_region
      %s117 = ssub.s32 2048, 2048
      %118 = vsyncadd [#allocation12], %s117
      %s119 = sshll.u32 [#allocation13], 4
      %s120 = int_to_ptr.vmem [resolvable:$true] %s119
      %125 = dma.hbm_to_vmem [thread:$0]  %s9, 2048, %s120, [#allocation12], 64, 64, 4
    $region41: #{tpu_custom_call.1} parent=1 // pred_fallthru
      _
    // Predicated region
    $region42: #{tpu_custom_call.1} parent=1 // pred_check
      _
    $region43: #{tpu_custom_call.1} parent=1 // pred_check_branch
      %127 = sbr.rel (0) target = $region45
    $region44: #{tpu_custom_call.1} parent=1 // pred_region
      _
    $region45: #{tpu_custom_call.1} parent=1 // pred_fallthru
      _
    // Predicated region
    $region46: #{tpu_custom_call.1} parent=1 // pred_check
      _
    $region47: #{tpu_custom_call.1} parent=1 // pred_check_branch
      %129 = sbr.rel (0) target = $region49
    $region48: #{tpu_custom_call.1} parent=1 // pred_region
      %130 = dma.done [#allocation3], 128
    $region49: #{tpu_custom_call.1} parent=1 // pred_fallthru
      _
    // Predicated region
    $region50: #{tpu_custom_call.1} parent=1 // pred_check
      _
    $region51: #{tpu_custom_call.1} parent=1 // pred_check_branch
      %132 = sbr.rel (0) target = $region53
    $region52: #{tpu_custom_call.1} parent=1 // pred_region
      %133 = dma.done [#allocation6], 256
    $region53: #{tpu_custom_call.1} parent=1 // pred_fallthru
      _
    // Predicated region
    $region54: #{tpu_custom_call.1} parent=1 // pred_check
      _
    $region55: #{tpu_custom_call.1} parent=1 // pred_check_branch
      %135 = sbr.rel (0) target = $region57
    $region56: #{tpu_custom_call.1} parent=1 // pred_region
      %136 = dma.done [#allocation6], 256
    $region57: #{tpu_custom_call.1} parent=1 // pred_fallthru
      _
    // Predicated region
    $region58: #{tpu_custom_call.1} parent=1 // pred_check
      _
    $region59: #{tpu_custom_call.1} parent=1 // pred_check_branch
      %138 = sbr.rel (0) target = $region61
    $region60: #{tpu_custom_call.1} parent=1 // pred_region
      %139 = dma.done [#allocation9], 3072
    $region61: #{tpu_custom_call.1} parent=1 // pred_fallthru
      _
    // Predicated region
    $region62: #{tpu_custom_call.1} parent=1 // pred_check
      _
    $region63: #{tpu_custom_call.1} parent=1 // pred_check_branch
      %141 = sbr.rel (0) target = $region65
    $region64: #{tpu_custom_call.1} parent=1 // pred_region
      %142 = dma.done [#allocation9], 32768
    $region65: #{tpu_custom_call.1} parent=1 // pred_fallthru
      _
    // Predicated region
    $region66: #{tpu_custom_call.1} parent=1 // pred_check
      _
    $region67: #{tpu_custom_call.1} parent=1 // pred_check_branch
      %144 = sbr.rel (0) target = $region69
    $region68: #{tpu_custom_call.1} parent=1 // pred_region
      %145 = dma.done [#allocation12], 8192
    $region69: #{tpu_custom_call.1} parent=1 // pred_fallthru
      _
    // Predicated region
    $region70: #{tpu_custom_call.1} parent=1 // pred_check
      _
    $region71: #{tpu_custom_call.1} parent=1 // pred_check_branch
      %147 = sbr.rel (0) target = $region73
    $region72: #{tpu_custom_call.1} parent=1 // pred_region
      %148 = dma.done [#allocation12], 2048
    $region73: #{tpu_custom_call.1} parent=1 // pred_fallthru
      _
    %s149 = sadd.s32 0, 0
    %s150 = smul.u32 2, %s149
    %s151 = sadd.s32 0, 0
    %s152 = smul.u32 2, %s151
    %s153 = sadd.s32 0, 0
    %s154 = smul.u32 2, %s153
    %p156 = scmp.eq.s32.totalorder 0, 0
    // Predicated region
    $region74: #{tpu_custom_call.1} parent=1 // pred_check
      %p157 = pneg %p156
    $region75: #{tpu_custom_call.1} parent=1 // pred_check_branch
      %159 = sbr.rel (%p157) target = $region77
    $region76: #{tpu_custom_call.1} parent=1 // pred_region
      %160 = vst [vmem:[#allocation14] sm:$0xff] 0.0
      %161 = vst [vmem:[#allocation15] sm:$0xff] 0.0
    $region77: #{tpu_custom_call.1} parent=1 // pred_fallthru
      _
    %v162 = vld [vmem:[#allocation2] sm:$0xf]
    %v163 = vld [vmem:[#allocation2 + $0x4] sm:$0xf]
    %v164 = vld [vmem:[#allocation8] sm:$0xff]
    %v165 = vld [vmem:[#allocation8 + $0x8] sm:$0xff]
    %v166 = vld [vmem:[#allocation8 + $0x10] sm:$0xff]
    %v167 = vld [vmem:[#allocation8 + $0x18] sm:$0xff]
    %v168 = vld [vmem:[#allocation8 + $0x20] sm:$0xff]
    %v169 = vld [vmem:[#allocation8 + $0x28] sm:$0xff]
    %v170 = vld [vmem:[#allocation8 + $0x30] sm:$0xff]
    %v171 = vld [vmem:[#allocation8 + $0x38] sm:$0xff]
    %v172 = vld [vmem:[#allocation8 + $0x40] sm:$0xff]
    %v173 = vld [vmem:[#allocation8 + $0x48] sm:$0xff]
    %v174 = vld [vmem:[#allocation8 + $0x50] sm:$0xff]
    %v175 = vld [vmem:[#allocation8 + $0x58] sm:$0xff]
    %v176 = vld [vmem:[#allocation8 + $0x60] sm:$0xff]
    %v177 = vld [vmem:[#allocation8 + $0x68] sm:$0xff]
    %v178 = vld [vmem:[#allocation8 + $0x70] sm:$0xff]
    %v179 = vld [vmem:[#allocation8 + $0x78] sm:$0xff]
    %v180 = vld [vmem:[#allocation8 + $0x80] sm:$0xff]
    %v181 = vld [vmem:[#allocation8 + $0x88] sm:$0xff]
    %v182 = vld [vmem:[#allocation8 + $0x90] sm:$0xff]
    %v183 = vld [vmem:[#allocation8 + $0x98] sm:$0xff]
    %v184 = vld [vmem:[#allocation8 + $0xa0] sm:$0xff]
    %v185 = vld [vmem:[#allocation8 + $0xa8] sm:$0xff]
    %v186 = vld [vmem:[#allocation8 + $0xb0] sm:$0xff]
    %v187 = vld [vmem:[#allocation8 + $0xb8] sm:$0xff]
    %v188 = vld [vmem:[%s4] sm:$0xff]
    %v190 = vlaneseq
    %v191 = vshrl.u32 %v190, 7
    %v192 = vsub.s32 0, %v191
    %v193 = vrot.slane %v188, %v192
    %v194 = vlaneseq
    %v195 = vshrl.u32 %v194, 7
    %v196 = vsub.s32 1, %v195
    %v197 = vrot.slane %v188, %v196
    %v198 = vlaneseq
    %v199 = vshrl.u32 %v198, 7
    %v200 = vsub.s32 2, %v199
    %v201 = vrot.slane %v188, %v200
    %v202 = vlaneseq
    %v203 = vshrl.u32 %v202, 7
    %v204 = vsub.s32 3, %v203
    %v205 = vrot.slane %v188, %v204
    %v206 = vlaneseq
    %v207 = vshrl.u32 %v206, 7
    %v208 = vsub.s32 4, %v207
    %v209 = vrot.slane %v188, %v208
    %v210 = vlaneseq
    %v211 = vshrl.u32 %v210, 7
    %v212 = vsub.s32 5, %v211
    %v213 = vrot.slane %v188, %v212
    %v214 = vlaneseq
    %v215 = vshrl.u32 %v214, 7
    %v216 = vsub.s32 6, %v215
    %v217 = vrot.slane %v188, %v216
    %v218 = vlaneseq
    %v219 = vshrl.u32 %v218, 7
    %v220 = vsub.s32 7, %v219
    %v221 = vrot.slane %v188, %v220
    %v232 = vunpack.c.l.b16 %v162
    %v233 = vunpack.c.l.b16 %v163
    %v234 = vpack.c.b16 %v233, %v232
    %v259 = vunpack.c.l.b16 %v164
    %v260 = vunpack.c.h.b16 %v164
    %v261 = vunpack.c.l.b16 %v165
    %v262 = vunpack.c.h.b16 %v165
    %v263 = vunpack.c.l.b16 %v166
    %v264 = vunpack.c.h.b16 %v166
    %v265 = vunpack.c.l.b16 %v167
    %v266 = vunpack.c.h.b16 %v167
    %v267 = vunpack.c.l.b16 %v168
    %v268 = vunpack.c.h.b16 %v168
    %v269 = vunpack.c.l.b16 %v169
    %v270 = vunpack.c.h.b16 %v169
    %v271 = vunpack.c.l.b16 %v170
    %v272 = vunpack.c.h.b16 %v170
    %v273 = vunpack.c.l.b16 %v171
    %v274 = vunpack.c.h.b16 %v171
    %v275 = vunpack.c.l.b16 %v172
    %v276 = vunpack.c.h.b16 %v172
    %v277 = vunpack.c.l.b16 %v173
    %v278 = vunpack.c.h.b16 %v173
    %v279 = vunpack.c.l.b16 %v174
    %v280 = vunpack.c.h.b16 %v174
    %v281 = vunpack.c.l.b16 %v175
    %v282 = vunpack.c.h.b16 %v175
    %v283 = vunpack.c.l.b16 %v176
    %v284 = vunpack.c.h.b16 %v176
    %v285 = vunpack.c.l.b16 %v177
    %v286 = vunpack.c.h.b16 %v177
    %v287 = vunpack.c.l.b16 %v178
    %v288 = vunpack.c.h.b16 %v178
    %v289 = vunpack.c.l.b16 %v179
    %v290 = vunpack.c.h.b16 %v179
    %v291 = vunpack.c.l.b16 %v180
    %v292 = vunpack.c.h.b16 %v180
    %v293 = vunpack.c.l.b16 %v181
    %v294 = vunpack.c.h.b16 %v181
    %v295 = vunpack.c.l.b16 %v182
    %v296 = vunpack.c.h.b16 %v182
    %v297 = vunpack.c.l.b16 %v183
    %v298 = vunpack.c.h.b16 %v183
    %v299 = vunpack.c.l.b16 %v184
    %v300 = vunpack.c.h.b16 %v184
    %v301 = vunpack.c.l.b16 %v185
    %v302 = vunpack.c.h.b16 %v185
    %v303 = vunpack.c.l.b16 %v186
    %v304 = vunpack.c.h.b16 %v186
    %v305 = vunpack.c.l.b16 %v187
    %v306 = vunpack.c.h.b16 %v187
    %v307 = vpack.c.b16 %v267, %v259
    %v308 = vpack.c.b16 %v268, %v260
    %v309 = vpack.c.b16 %v269, %v261
    %v310 = vpack.c.b16 %v270, %v262
    %v311 = vpack.c.b16 %v271, %v263
    %v312 = vpack.c.b16 %v272, %v264
    %v313 = vpack.c.b16 %v273, %v265
    %v314 = vpack.c.b16 %v274, %v266
    %v315 = vpack.c.b16 %v283, %v275
    %v316 = vpack.c.b16 %v284, %v276
    %v317 = vpack.c.b16 %v285, %v277
    %v318 = vpack.c.b16 %v286, %v278
    %v319 = vpack.c.b16 %v287, %v279
    %v320 = vpack.c.b16 %v288, %v280
    %v321 = vpack.c.b16 %v289, %v281
    %v322 = vpack.c.b16 %v290, %v282
    %v323 = vpack.c.b16 %v299, %v291
    %v324 = vpack.c.b16 %v300, %v292
    %v325 = vpack.c.b16 %v301, %v293
    %v326 = vpack.c.b16 %v302, %v294
    %v327 = vpack.c.b16 %v303, %v295
    %v328 = vpack.c.b16 %v304, %v296
    %v329 = vpack.c.b16 %v305, %v297
    %v330 = vpack.c.b16 %v306, %v298
    %vm355 = vcmask 392192
    %v357 = vsel %vm355, %v234, 0
    %359 = vmatprep.subr.bf16.mxu0 %v308
    %360 = vmatpush1.bf16.msra.mxu0 %v307
    %361 = vmatprep.subr.bf16.mxu0 %v316
    %362 = vmatpush1.bf16.msra.mxu0 %v315
    %363 = vmatprep.subr.bf16.mxu0 %v324
    %364 = vmatpush1.bf16.msra.mxu0 %v323
    %365 = vmatprep.subr.bf16.mxu0 0
    %366 = vmatpush1.bf16.msra.mxu0 0
    %367 = vmatprep.subr.bf16.mxu0 0
    %368 = vmatpush1.bf16.msra.mxu0 0
    %369 = vmatprep.subr.bf16.mxu0 0
    %370 = vmatpush1.bf16.msra.mxu0 0
    %371 = vmatprep.subr.bf16.mxu0 0
    %372 = vmatpush1.bf16.msra.mxu0 0
    %373 = vmatprep.subr.bf16.mxu0 0
    %374 = vmatpush1.bf16.msra.mxu0 0
    %375 = vmatprep.subr.bf16.mxu0 0
    %376 = vmatpush1.bf16.msra.mxu0 0
    %377 = vmatprep.subr.bf16.mxu0 0
    %378 = vmatpush1.bf16.msra.mxu0 0
    %379 = vmatprep.subr.bf16.mxu0 0
    %380 = vmatpush1.bf16.msra.mxu0 0
    %381 = vmatprep.subr.bf16.mxu0 0
    %382 = vmatpush1.bf16.msra.mxu0 0
    %383 = vmatprep.subr.bf16.mxu0 0
    %384 = vmatpush1.bf16.msra.mxu0 0
    %385 = vmatprep.subr.bf16.mxu0 0
    %386 = vmatpush1.bf16.msra.mxu0 0
    %387 = vmatprep.subr.bf16.mxu0 0
    %388 = vmatpush1.bf16.msra.mxu0 0
    %389 = vmatprep.subr.bf16.mxu0 0
    %390 = vmatpush1.bf16.msra.mxu0 0
    %391 = vmatprep.mubr.bf16.mxu0 0
    %392 = vmatmul.mubr.bf16.gmra.mrb[0].mxu0 %v357
    %v393 = vpop.f32.mrb[0].mxu0
    %v394 = vadd.f32 %v193, %v393
    %v395 = vpop.f32.mrb[0].mxu0
    %v396 = vadd.f32 %v197, %v395
    %v397 = vpop.f32.mrb[0].mxu0
    %v398 = vadd.f32 %v193, %v397
    %v399 = vpop.f32.mrb[0].mxu0
    %v400 = vadd.f32 %v197, %v399
    %401 = vdwg.mxu0
    %402 = vmatprep.subr.bf16.mxu0 %v310
    %403 = vmatpush1.bf16.msra.mxu0 %v309
    %404 = vmatprep.subr.bf16.mxu0 %v318
    %405 = vmatpush1.bf16.msra.mxu0 %v317
    %406 = vmatprep.subr.bf16.mxu0 %v326
    %407 = vmatpush1.bf16.msra.mxu0 %v325
    %408 = vmatprep.subr.bf16.mxu0 0
    %409 = vmatpush1.bf16.msra.mxu0 0
    %410 = vmatprep.subr.bf16.mxu0 0
    %411 = vmatpush1.bf16.msra.mxu0 0
    %412 = vmatprep.subr.bf16.mxu0 0
    %413 = vmatpush1.bf16.msra.mxu0 0
    %414 = vmatprep.subr.bf16.mxu0 0
    %415 = vmatpush1.bf16.msra.mxu0 0
    %416 = vmatprep.subr.bf16.mxu0 0
    %417 = vmatpush1.bf16.msra.mxu0 0
    %418 = vmatprep.subr.bf16.mxu0 0
    %419 = vmatpush1.bf16.msra.mxu0 0
    %420 = vmatprep.subr.bf16.mxu0 0
    %421 = vmatpush1.bf16.msra.mxu0 0
    %422 = vmatprep.subr.bf16.mxu0 0
    %423 = vmatpush1.bf16.msra.mxu0 0
    %424 = vmatprep.subr.bf16.mxu0 0
    %425 = vmatpush1.bf16.msra.mxu0 0
    %426 = vmatprep.subr.bf16.mxu0 0
    %427 = vmatpush1.bf16.msra.mxu0 0
    %428 = vmatprep.subr.bf16.mxu0 0
    %429 = vmatpush1.bf16.msra.mxu0 0
    %430 = vmatprep.subr.bf16.mxu0 0
    %431 = vmatpush1.bf16.msra.mxu0 0
    %432 = vmatprep.subr.bf16.mxu0 0
    %433 = vmatpush1.bf16.msra.mxu0 0
    %434 = vmatprep.mubr.bf16.mxu0 0
    %435 = vmatmul.mubr.bf16.gmra.mrb[0].mxu0 %v357
    %v436 = vpop.f32.mrb[0].mxu0
    %v437 = vadd.f32 %v201, %v436
    %v438 = vpop.f32.mrb[0].mxu0
    %v439 = vadd.f32 %v205, %v438
    %v440 = vpop.f32.mrb[0].mxu0
    %v441 = vadd.f32 %v201, %v440
    %v442 = vpop.f32.mrb[0].mxu0
    %v443 = vadd.f32 %v205, %v442
    %444 = vdwg.mxu0
    %445 = vmatprep.subr.bf16.mxu0 %v312
    %446 = vmatpush1.bf16.msra.mxu0 %v311
    %447 = vmatprep.subr.bf16.mxu0 %v320
    %448 = vmatpush1.bf16.msra.mxu0 %v319
    %449 = vmatprep.subr.bf16.mxu0 %v328
    %450 = vmatpush1.bf16.msra.mxu0 %v327
    %451 = vmatprep.subr.bf16.mxu0 0
    %452 = vmatpush1.bf16.msra.mxu0 0
    %453 = vmatprep.subr.bf16.mxu0 0
    %454 = vmatpush1.bf16.msra.mxu0 0
    %455 = vmatprep.subr.bf16.mxu0 0
    %456 = vmatpush1.bf16.msra.mxu0 0
    %457 = vmatprep.subr.bf16.mxu0 0
    %458 = vmatpush1.bf16.msra.mxu0 0
    %459 = vmatprep.subr.bf16.mxu0 0
    %460 = vmatpush1.bf16.msra.mxu0 0
    %461 = vmatprep.subr.bf16.mxu0 0
    %462 = vmatpush1.bf16.msra.mxu0 0
    %463 = vmatprep.subr.bf16.mxu0 0
    %464 = vmatpush1.bf16.msra.mxu0 0
    %465 = vmatprep.subr.bf16.mxu0 0
    %466 = vmatpush1.bf16.msra.mxu0 0
    %467 = vmatprep.subr.bf16.mxu0 0
    %468 = vmatpush1.bf16.msra.mxu0 0
    %469 = vmatprep.subr.bf16.mxu0 0
    %470 = vmatpush1.bf16.msra.mxu0 0
    %471 = vmatprep.subr.bf16.mxu0 0
    %472 = vmatpush1.bf16.msra.mxu0 0
    %473 = vmatprep.subr.bf16.mxu0 0
    %474 = vmatpush1.bf16.msra.mxu0 0
    %475 = vmatprep.subr.bf16.mxu0 0
    %476 = vmatpush1.bf16.msra.mxu0 0
    %477 = vmatprep.mubr.bf16.mxu0 0
    %478 = vmatmul.mubr.bf16.gmra.mrb[0].mxu0 %v357
    %v479 = vpop.f32.mrb[0].mxu0
    %v480 = vadd.f32 %v209, %v479
    %v481 = vpop.f32.mrb[0].mxu0
    %v482 = vadd.f32 %v213, %v481
    %v483 = vpop.f32.mrb[0].mxu0
    %v484 = vadd.f32 %v209, %v483
    %v485 = vpop.f32.mrb[0].mxu0
    %v486 = vadd.f32 %v213, %v485
    %487 = vdwg.mxu0
    %488 = vmatprep.subr.bf16.mxu0 %v314
    %489 = vmatpush1.bf16.msra.mxu0 %v313
    %490 = vmatprep.subr.bf16.mxu0 %v322
    %491 = vmatpush1.bf16.msra.mxu0 %v321
    %492 = vmatprep.subr.bf16.mxu0 %v330
    %493 = vmatpush1.bf16.msra.mxu0 %v329
    %494 = vmatprep.subr.bf16.mxu0 0
    %495 = vmatpush1.bf16.msra.mxu0 0
    %496 = vmatprep.subr.bf16.mxu0 0
    %497 = vmatpush1.bf16.msra.mxu0 0
    %498 = vmatprep.subr.bf16.mxu0 0
    %499 = vmatpush1.bf16.msra.mxu0 0
    %500 = vmatprep.subr.bf16.mxu0 0
    %501 = vmatpush1.bf16.msra.mxu0 0
    %502 = vmatprep.subr.bf16.mxu0 0
    %503 = vmatpush1.bf16.msra.mxu0 0
    %504 = vmatprep.subr.bf16.mxu0 0
    %505 = vmatpush1.bf16.msra.mxu0 0
    %506 = vmatprep.subr.bf16.mxu0 0
    %507 = vmatpush1.bf16.msra.mxu0 0
    %508 = vmatprep.subr.bf16.mxu0 0
    %509 = vmatpush1.bf16.msra.mxu0 0
    %510 = vmatprep.subr.bf16.mxu0 0
    %511 = vmatpush1.bf16.msra.mxu0 0
    %512 = vmatprep.subr.bf16.mxu0 0
    %513 = vmatpush1.bf16.msra.mxu0 0
    %514 = vmatprep.subr.bf16.mxu0 0
    %515 = vmatpush1.bf16.msra.mxu0 0
    %516 = vmatprep.subr.bf16.mxu0 0
    %517 = vmatpush1.bf16.msra.mxu0 0
    %518 = vmatprep.subr.bf16.mxu0 0
    %519 = vmatpush1.bf16.msra.mxu0 0
    %520 = vmatprep.mubr.bf16.mxu0 0
    %521 = vmatmul.mubr.bf16.gmra.mrb[0].mxu0 %v357
    %v522 = vpop.f32.mrb[0].mxu0
    %v523 = vadd.f32 %v217, %v522
    %v524 = vpop.f32.mrb[0].mxu0
    %v525 = vadd.f32 %v221, %v524
    %v526 = vpop.f32.mrb[0].mxu0
    %v527 = vadd.f32 %v217, %v526
    %v528 = vpop.f32.mrb[0].mxu0
    %v529 = vadd.f32 %v221, %v528
    %530 = vdwg.mxu0
    %v531 = vmax.f32 %v394, 0.0
    %v532 = vmax.f32 %v396, 0.0
    %v533 = vmax.f32 %v437, 0.0
    %v534 = vmax.f32 %v439, 0.0
    %v535 = vmax.f32 %v480, 0.0
    %v536 = vmax.f32 %v482, 0.0
    %v537 = vmax.f32 %v523, 0.0
    %v538 = vmax.f32 %v525, 0.0
    %v539 = vmax.f32 %v398, 0.0
    %v540 = vmax.f32 %v400, 0.0
    %v541 = vmax.f32 %v441, 0.0
    %v542 = vmax.f32 %v443, 0.0
    %v543 = vmax.f32 %v484, 0.0
    %v544 = vmax.f32 %v486, 0.0
    %v545 = vmax.f32 %v527, 0.0
    %v546 = vmax.f32 %v529, 0.0
    %v547 = vpack.c.bf16 %v539, %v531
    %v548 = vpack.c.bf16 %v540, %v532
    %v549 = vpack.c.bf16 %v541, %v533
    %v550 = vpack.c.bf16 %v542, %v534
    %v551 = vpack.c.bf16 %v543, %v535
    %v552 = vpack.c.bf16 %v544, %v536
    %v553 = vpack.c.bf16 %v545, %v537
    %v554 = vpack.c.bf16 %v546, %v538
    %v555 = vld [vmem:[#allocation10] sm:$0xff]
    %v556 = vld [vmem:[#allocation10 + $0x8] sm:$0xff]
    %v557 = vld [vmem:[#allocation10 + $0x10] sm:$0xff]
    %v558 = vld [vmem:[#allocation10 + $0x18] sm:$0xff]
    %v559 = vld [vmem:[#allocation10 + $0x20] sm:$0xff]
    %v560 = vld [vmem:[#allocation10 + $0x28] sm:$0xff]
    %v561 = vld [vmem:[#allocation10 + $0x30] sm:$0xff]
    %v562 = vld [vmem:[#allocation10 + $0x38] sm:$0xff]
    %v563 = vld [vmem:[#allocation10 + $0x40] sm:$0xff]
    %v564 = vld [vmem:[#allocation10 + $0x48] sm:$0xff]
    %v565 = vld [vmem:[#allocation10 + $0x50] sm:$0xff]
    %v566 = vld [vmem:[#allocation10 + $0x58] sm:$0xff]
    %v567 = vld [vmem:[#allocation10 + $0x60] sm:$0xff]
    %v568 = vld [vmem:[#allocation10 + $0x68] sm:$0xff]
    %v569 = vld [vmem:[#allocation10 + $0x70] sm:$0xff]
    %v570 = vld [vmem:[#allocation10 + $0x78] sm:$0xff]
    %v571 = vld [vmem:[#allocation10 + $0x80] sm:$0xff]
    %v572 = vld [vmem:[#allocation10 + $0x88] sm:$0xff]
    %v573 = vld [vmem:[#allocation10 + $0x90] sm:$0xff]
    %v574 = vld [vmem:[#allocation10 + $0x98] sm:$0xff]
    %v575 = vld [vmem:[#allocation10 + $0xa0] sm:$0xff]
    %v576 = vld [vmem:[#allocation10 + $0xa8] sm:$0xff]
    %v577 = vld [vmem:[#allocation10 + $0xb0] sm:$0xff]
    %v578 = vld [vmem:[#allocation10 + $0xb8] sm:$0xff]
    %v579 = vld [vmem:[#allocation10 + $0xc0] sm:$0xff]
    %v580 = vld [vmem:[#allocation10 + $0xc8] sm:$0xff]
    %v581 = vld [vmem:[#allocation10 + $0xd0] sm:$0xff]
    %v582 = vld [vmem:[#allocation10 + $0xd8] sm:$0xff]
    %v583 = vld [vmem:[#allocation10 + $0xe0] sm:$0xff]
    %v584 = vld [vmem:[#allocation10 + $0xe8] sm:$0xff]
    %v585 = vld [vmem:[#allocation10 + $0xf0] sm:$0xff]
    %v586 = vld [vmem:[#allocation10 + $0xf8] sm:$0xff]
    %v587 = vld [vmem:[#allocation10 + $0x100] sm:$0xff]
    %v588 = vld [vmem:[#allocation10 + $0x108] sm:$0xff]
    %v589 = vld [vmem:[#allocation10 + $0x110] sm:$0xff]
    %v590 = vld [vmem:[#allocation10 + $0x118] sm:$0xff]
    %v591 = vld [vmem:[#allocation10 + $0x120] sm:$0xff]
    %v592 = vld [vmem:[#allocation10 + $0x128] sm:$0xff]
    %v593 = vld [vmem:[#allocation10 + $0x130] sm:$0xff]
    %v594 = vld [vmem:[#allocation10 + $0x138] sm:$0xff]
    %v595 = vld [vmem:[#allocation10 + $0x140] sm:$0xff]
    %v596 = vld [vmem:[#allocation10 + $0x148] sm:$0xff]
    %v597 = vld [vmem:[#allocation10 + $0x150] sm:$0xff]
    %v598 = vld [vmem:[#allocation10 + $0x158] sm:$0xff]
    %v599 = vld [vmem:[#allocation10 + $0x160] sm:$0xff]
    %v600 = vld [vmem:[#allocation10 + $0x168] sm:$0xff]
    %v601 = vld [vmem:[#allocation10 + $0x170] sm:$0xff]
    %v602 = vld [vmem:[#allocation10 + $0x178] sm:$0xff]
    %v603 = vld [vmem:[#allocation10 + $0x180] sm:$0xff]
    %v604 = vld [vmem:[#allocation10 + $0x188] sm:$0xff]
    %v605 = vld [vmem:[#allocation10 + $0x190] sm:$0xff]
    %v606 = vld [vmem:[#allocation10 + $0x198] sm:$0xff]
    %v607 = vld [vmem:[#allocation10 + $0x1a0] sm:$0xff]
    %v608 = vld [vmem:[#allocation10 + $0x1a8] sm:$0xff]
    %v609 = vld [vmem:[#allocation10 + $0x1b0] sm:$0xff]
    %v610 = vld [vmem:[#allocation10 + $0x1b8] sm:$0xff]
    %v611 = vld [vmem:[#allocation10 + $0x1c0] sm:$0xff]
    %v612 = vld [vmem:[#allocation10 + $0x1c8] sm:$0xff]
    %v613 = vld [vmem:[#allocation10 + $0x1d0] sm:$0xff]
    %v614 = vld [vmem:[#allocation10 + $0x1d8] sm:$0xff]
    %v615 = vld [vmem:[#allocation10 + $0x1e0] sm:$0xff]
    %v616 = vld [vmem:[#allocation10 + $0x1e8] sm:$0xff]
    %v617 = vld [vmem:[#allocation10 + $0x1f0] sm:$0xff]
    %v618 = vld [vmem:[#allocation10 + $0x1f8] sm:$0xff]
    %v619 = vld [vmem:[#allocation10 + $0x200] sm:$0xff]
    %v620 = vld [vmem:[#allocation10 + $0x208] sm:$0xff]
    %v621 = vld [vmem:[#allocation10 + $0x210] sm:$0xff]
    %v622 = vld [vmem:[#allocation10 + $0x218] sm:$0xff]
    %v623 = vld [vmem:[#allocation10 + $0x220] sm:$0xff]
    %v624 = vld [vmem:[#allocation10 + $0x228] sm:$0xff]
    %v625 = vld [vmem:[#allocation10 + $0x230] sm:$0xff]
    %v626 = vld [vmem:[#allocation10 + $0x238] sm:$0xff]
    %v627 = vld [vmem:[#allocation10 + $0x240] sm:$0xff]
    %v628 = vld [vmem:[#allocation10 + $0x248] sm:$0xff]
    %v629 = vld [vmem:[#allocation10 + $0x250] sm:$0xff]
    %v630 = vld [vmem:[#allocation10 + $0x258] sm:$0xff]
    %v631 = vld [vmem:[#allocation10 + $0x260] sm:$0xff]
    %v632 = vld [vmem:[#allocation10 + $0x268] sm:$0xff]
    %v633 = vld [vmem:[#allocation10 + $0x270] sm:$0xff]
    %v634 = vld [vmem:[#allocation10 + $0x278] sm:$0xff]
    %v635 = vld [vmem:[#allocation10 + $0x280] sm:$0xff]
    %v636 = vld [vmem:[#allocation10 + $0x288] sm:$0xff]
    %v637 = vld [vmem:[#allocation10 + $0x290] sm:$0xff]
    %v638 = vld [vmem:[#allocation10 + $0x298] sm:$0xff]
    %v639 = vld [vmem:[#allocation10 + $0x2a0] sm:$0xff]
    %v640 = vld [vmem:[#allocation10 + $0x2a8] sm:$0xff]
    %v641 = vld [vmem:[#allocation10 + $0x2b0] sm:$0xff]
    %v642 = vld [vmem:[#allocation10 + $0x2b8] sm:$0xff]
    %v643 = vld [vmem:[#allocation10 + $0x2c0] sm:$0xff]
    %v644 = vld [vmem:[#allocation10 + $0x2c8] sm:$0xff]
    %v645 = vld [vmem:[#allocation10 + $0x2d0] sm:$0xff]
    %v646 = vld [vmem:[#allocation10 + $0x2d8] sm:$0xff]
    %v647 = vld [vmem:[#allocation10 + $0x2e0] sm:$0xff]
    %v648 = vld [vmem:[#allocation10 + $0x2e8] sm:$0xff]
    %v649 = vld [vmem:[#allocation10 + $0x2f0] sm:$0xff]
    %v650 = vld [vmem:[#allocation10 + $0x2f8] sm:$0xff]
    %v651 = vld [vmem:[#allocation10 + $0x300] sm:$0xff]
    %v652 = vld [vmem:[#allocation10 + $0x308] sm:$0xff]
    %v653 = vld [vmem:[#allocation10 + $0x310] sm:$0xff]
    %v654 = vld [vmem:[#allocation10 + $0x318] sm:$0xff]
    %v655 = vld [vmem:[#allocation10 + $0x320] sm:$0xff]
    %v656 = vld [vmem:[#allocation10 + $0x328] sm:$0xff]
    %v657 = vld [vmem:[#allocation10 + $0x330] sm:$0xff]
    %v658 = vld [vmem:[#allocation10 + $0x338] sm:$0xff]
    %v659 = vld [vmem:[#allocation10 + $0x340] sm:$0xff]
    %v660 = vld [vmem:[#allocation10 + $0x348] sm:$0xff]
    %v661 = vld [vmem:[#allocation10 + $0x350] sm:$0xff]
    %v662 = vld [vmem:[#allocation10 + $0x358] sm:$0xff]
    %v663 = vld [vmem:[#allocation10 + $0x360] sm:$0xff]
    %v664 = vld [vmem:[#allocation10 + $0x368] sm:$0xff]
    %v665 = vld [vmem:[#allocation10 + $0x370] sm:$0xff]
    %v666 = vld [vmem:[#allocation10 + $0x378] sm:$0xff]
    %v667 = vld [vmem:[#allocation10 + $0x380] sm:$0xff]
    %v668 = vld [vmem:[#allocation10 + $0x388] sm:$0xff]
    %v669 = vld [vmem:[#allocation10 + $0x390] sm:$0xff]
    %v670 = vld [vmem:[#allocation10 + $0x398] sm:$0xff]
    %v671 = vld [vmem:[#allocation10 + $0x3a0] sm:$0xff]
    %v672 = vld [vmem:[#allocation10 + $0x3a8] sm:$0xff]
    %v673 = vld [vmem:[#allocation10 + $0x3b0] sm:$0xff]
    %v674 = vld [vmem:[#allocation10 + $0x3b8] sm:$0xff]
    %v675 = vld [vmem:[#allocation10 + $0x3c0] sm:$0xff]
    %v676 = vld [vmem:[#allocation10 + $0x3c8] sm:$0xff]
    %v677 = vld [vmem:[#allocation10 + $0x3d0] sm:$0xff]
    %v678 = vld [vmem:[#allocation10 + $0x3d8] sm:$0xff]
    %v679 = vld [vmem:[#allocation10 + $0x3e0] sm:$0xff]
    %v680 = vld [vmem:[#allocation10 + $0x3e8] sm:$0xff]
    %v681 = vld [vmem:[#allocation10 + $0x3f0] sm:$0xff]
    %v682 = vld [vmem:[#allocation10 + $0x3f8] sm:$0xff]
    %v683 = vld [vmem:[#allocation10 + $0x400] sm:$0xff]
    %v684 = vld [vmem:[#allocation10 + $0x408] sm:$0xff]
    %v685 = vld [vmem:[#allocation10 + $0x410] sm:$0xff]
    %v686 = vld [vmem:[#allocation10 + $0x418] sm:$0xff]
    %v687 = vld [vmem:[#allocation10 + $0x420] sm:$0xff]
    %v688 = vld [vmem:[#allocation10 + $0x428] sm:$0xff]
    %v689 = vld [vmem:[#allocation10 + $0x430] sm:$0xff]
    %v690 = vld [vmem:[#allocation10 + $0x438] sm:$0xff]
    %v691 = vld [vmem:[#allocation10 + $0x440] sm:$0xff]
    %v692 = vld [vmem:[#allocation10 + $0x448] sm:$0xff]
    %v693 = vld [vmem:[#allocation10 + $0x450] sm:$0xff]
    %v694 = vld [vmem:[#allocation10 + $0x458] sm:$0xff]
    %v695 = vld [vmem:[#allocation10 + $0x460] sm:$0xff]
    %v696 = vld [vmem:[#allocation10 + $0x468] sm:$0xff]
    %v697 = vld [vmem:[#allocation10 + $0x470] sm:$0xff]
    %v698 = vld [vmem:[#allocation10 + $0x478] sm:$0xff]
    %v699 = vld [vmem:[#allocation10 + $0x480] sm:$0xff]
    %v700 = vld [vmem:[#allocation10 + $0x488] sm:$0xff]
    %v701 = vld [vmem:[#allocation10 + $0x490] sm:$0xff]
    %v702 = vld [vmem:[#allocation10 + $0x498] sm:$0xff]
    %v703 = vld [vmem:[#allocation10 + $0x4a0] sm:$0xff]
    %v704 = vld [vmem:[#allocation10 + $0x4a8] sm:$0xff]
    %v705 = vld [vmem:[#allocation10 + $0x4b0] sm:$0xff]
    %v706 = vld [vmem:[#allocation10 + $0x4b8] sm:$0xff]
    %v707 = vld [vmem:[#allocation10 + $0x4c0] sm:$0xff]
    %v708 = vld [vmem:[#allocation10 + $0x4c8] sm:$0xff]
    %v709 = vld [vmem:[#allocation10 + $0x4d0] sm:$0xff]
    %v710 = vld [vmem:[#allocation10 + $0x4d8] sm:$0xff]
    %v711 = vld [vmem:[#allocation10 + $0x4e0] sm:$0xff]
    %v712 = vld [vmem:[#allocation10 + $0x4e8] sm:$0xff]
    %v713 = vld [vmem:[#allocation10 + $0x4f0] sm:$0xff]
    %v714 = vld [vmem:[#allocation10 + $0x4f8] sm:$0xff]
    %v715 = vld [vmem:[#allocation10 + $0x500] sm:$0xff]
    %v716 = vld [vmem:[#allocation10 + $0x508] sm:$0xff]
    %v717 = vld [vmem:[#allocation10 + $0x510] sm:$0xff]
    %v718 = vld [vmem:[#allocation10 + $0x518] sm:$0xff]
    %v719 = vld [vmem:[#allocation10 + $0x520] sm:$0xff]
    %v720 = vld [vmem:[#allocation10 + $0x528] sm:$0xff]
    %v721 = vld [vmem:[#allocation10 + $0x530] sm:$0xff]
    %v722 = vld [vmem:[#allocation10 + $0x538] sm:$0xff]
    %v723 = vld [vmem:[#allocation10 + $0x540] sm:$0xff]
    %v724 = vld [vmem:[#allocation10 + $0x548] sm:$0xff]
    %v725 = vld [vmem:[#allocation10 + $0x550] sm:$0xff]
    %v726 = vld [vmem:[#allocation10 + $0x558] sm:$0xff]
    %v727 = vld [vmem:[#allocation10 + $0x560] sm:$0xff]
    %v728 = vld [vmem:[#allocation10 + $0x568] sm:$0xff]
    %v729 = vld [vmem:[#allocation10 + $0x570] sm:$0xff]
    %v730 = vld [vmem:[#allocation10 + $0x578] sm:$0xff]
    %v731 = vld [vmem:[#allocation10 + $0x580] sm:$0xff]
    %v732 = vld [vmem:[#allocation10 + $0x588] sm:$0xff]
    %v733 = vld [vmem:[#allocation10 + $0x590] sm:$0xff]
    %v734 = vld [vmem:[#allocation10 + $0x598] sm:$0xff]
    %v735 = vld [vmem:[#allocation10 + $0x5a0] sm:$0xff]
    %v736 = vld [vmem:[#allocation10 + $0x5a8] sm:$0xff]
    %v737 = vld [vmem:[#allocation10 + $0x5b0] sm:$0xff]
    %v738 = vld [vmem:[#allocation10 + $0x5b8] sm:$0xff]
    %v739 = vld [vmem:[#allocation10 + $0x5c0] sm:$0xff]
    %v740 = vld [vmem:[#allocation10 + $0x5c8] sm:$0xff]
    %v741 = vld [vmem:[#allocation10 + $0x5d0] sm:$0xff]
    %v742 = vld [vmem:[#allocation10 + $0x5d8] sm:$0xff]
    %v743 = vld [vmem:[#allocation10 + $0x5e0] sm:$0xff]
    %v744 = vld [vmem:[#allocation10 + $0x5e8] sm:$0xff]
    %v745 = vld [vmem:[#allocation10 + $0x5f0] sm:$0xff]
    %v746 = vld [vmem:[#allocation10 + $0x5f8] sm:$0xff]
    %v747 = vld [vmem:[#allocation10 + $0x600] sm:$0xff]
    %v748 = vld [vmem:[#allocation10 + $0x608] sm:$0xff]
    %v749 = vld [vmem:[#allocation10 + $0x610] sm:$0xff]
    %v750 = vld [vmem:[#allocation10 + $0x618] sm:$0xff]
    %v751 = vld [vmem:[#allocation10 + $0x620] sm:$0xff]
    %v752 = vld [vmem:[#allocation10 + $0x628] sm:$0xff]
    %v753 = vld [vmem:[#allocation10 + $0x630] sm:$0xff]
    %v754 = vld [vmem:[#allocation10 + $0x638] sm:$0xff]
    %v755 = vld [vmem:[#allocation10 + $0x640] sm:$0xff]
    %v756 = vld [vmem:[#allocation10 + $0x648] sm:$0xff]
    %v757 = vld [vmem:[#allocation10 + $0x650] sm:$0xff]
    %v758 = vld [vmem:[#allocation10 + $0x658] sm:$0xff]
    %v759 = vld [vmem:[#allocation10 + $0x660] sm:$0xff]
    %v760 = vld [vmem:[#allocation10 + $0x668] sm:$0xff]
    %v761 = vld [vmem:[#allocation10 + $0x670] sm:$0xff]
    %v762 = vld [vmem:[#allocation10 + $0x678] sm:$0xff]
    %v763 = vld [vmem:[#allocation10 + $0x680] sm:$0xff]
    %v764 = vld [vmem:[#allocation10 + $0x688] sm:$0xff]
    %v765 = vld [vmem:[#allocation10 + $0x690] sm:$0xff]
    %v766 = vld [vmem:[#allocation10 + $0x698] sm:$0xff]
    %v767 = vld [vmem:[#allocation10 + $0x6a0] sm:$0xff]
    %v768 = vld [vmem:[#allocation10 + $0x6a8] sm:$0xff]
    %v769 = vld [vmem:[#allocation10 + $0x6b0] sm:$0xff]
    %v770 = vld [vmem:[#allocation10 + $0x6b8] sm:$0xff]
    %v771 = vld [vmem:[#allocation10 + $0x6c0] sm:$0xff]
    %v772 = vld [vmem:[#allocation10 + $0x6c8] sm:$0xff]
    %v773 = vld [vmem:[#allocation10 + $0x6d0] sm:$0xff]
    %v774 = vld [vmem:[#allocation10 + $0x6d8] sm:$0xff]
    %v775 = vld [vmem:[#allocation10 + $0x6e0] sm:$0xff]
    %v776 = vld [vmem:[#allocation10 + $0x6e8] sm:$0xff]
    %v777 = vld [vmem:[#allocation10 + $0x6f0] sm:$0xff]
    %v778 = vld [vmem:[#allocation10 + $0x6f8] sm:$0xff]
    %v779 = vld [vmem:[#allocation10 + $0x700] sm:$0xff]
    %v780 = vld [vmem:[#allocation10 + $0x708] sm:$0xff]
    %v781 = vld [vmem:[#allocation10 + $0x710] sm:$0xff]
    %v782 = vld [vmem:[#allocation10 + $0x718] sm:$0xff]
    %v783 = vld [vmem:[#allocation10 + $0x720] sm:$0xff]
    %v784 = vld [vmem:[#allocation10 + $0x728] sm:$0xff]
    %v785 = vld [vmem:[#allocation10 + $0x730] sm:$0xff]
    %v786 = vld [vmem:[#allocation10 + $0x738] sm:$0xff]
    %v787 = vld [vmem:[#allocation10 + $0x740] sm:$0xff]
    %v788 = vld [vmem:[#allocation10 + $0x748] sm:$0xff]
    %v789 = vld [vmem:[#allocation10 + $0x750] sm:$0xff]
    %v790 = vld [vmem:[#allocation10 + $0x758] sm:$0xff]
    %v791 = vld [vmem:[#allocation10 + $0x760] sm:$0xff]
    %v792 = vld [vmem:[#allocation10 + $0x768] sm:$0xff]
    %v793 = vld [vmem:[#allocation10 + $0x770] sm:$0xff]
    %v794 = vld [vmem:[#allocation10 + $0x778] sm:$0xff]
    %v795 = vld [vmem:[#allocation10 + $0x780] sm:$0xff]
    %v796 = vld [vmem:[#allocation10 + $0x788] sm:$0xff]
    %v797 = vld [vmem:[#allocation10 + $0x790] sm:$0xff]
    %v798 = vld [vmem:[#allocation10 + $0x798] sm:$0xff]
    %v799 = vld [vmem:[#allocation10 + $0x7a0] sm:$0xff]
    %v800 = vld [vmem:[#allocation10 + $0x7a8] sm:$0xff]
    %v801 = vld [vmem:[#allocation10 + $0x7b0] sm:$0xff]
    %v802 = vld [vmem:[#allocation10 + $0x7b8] sm:$0xff]
    %v803 = vld [vmem:[#allocation10 + $0x7c0] sm:$0xff]
    %v804 = vld [vmem:[#allocation10 + $0x7c8] sm:$0xff]
    %v805 = vld [vmem:[#allocation10 + $0x7d0] sm:$0xff]
    %v806 = vld [vmem:[#allocation10 + $0x7d8] sm:$0xff]
    %v807 = vld [vmem:[#allocation10 + $0x7e0] sm:$0xff]
    %v808 = vld [vmem:[#allocation10 + $0x7e8] sm:$0xff]
    %v809 = vld [vmem:[#allocation10 + $0x7f0] sm:$0xff]
    %v810 = vld [vmem:[#allocation10 + $0x7f8] sm:$0xff]
    %v811 = vld [vmem:[%s6] sm:$0xf]
    %v813 = vlaneseq
    %v814 = vshrl.u32 %v813, 7
    %v815 = vsub.s32 0, %v814
    %v816 = vrot.slane %v811, %v815
    %v817 = vlaneseq
    %v818 = vshrl.u32 %v817, 7
    %v819 = vsub.s32 1, %v818
    %v820 = vrot.slane %v811, %v819
    %v821 = vlaneseq
    %v822 = vshrl.u32 %v821, 7
    %v823 = vsub.s32 2, %v822
    %v824 = vrot.slane %v811, %v823
    %v825 = vlaneseq
    %v826 = vshrl.u32 %v825, 7
    %v827 = vsub.s32 3, %v826
    %v828 = vrot.slane %v811, %v827
    %v1089 = vunpack.c.l.b16 %v555
    %v1090 = vunpack.c.h.b16 %v555
    %v1091 = vunpack.c.l.b16 %v556
    %v1092 = vunpack.c.h.b16 %v556
    %v1093 = vunpack.c.l.b16 %v557
    %v1094 = vunpack.c.h.b16 %v557
    %v1095 = vunpack.c.l.b16 %v558
    %v1096 = vunpack.c.h.b16 %v558
    %v1097 = vunpack.c.l.b16 %v559
    %v1098 = vunpack.c.h.b16 %v559
    %v1099 = vunpack.c.l.b16 %v560
    %v1100 = vunpack.c.h.b16 %v560
    %v1101 = vunpack.c.l.b16 %v561
    %v1102 = vunpack.c.h.b16 %v561
    %v1103 = vunpack.c.l.b16 %v562
    %v1104 = vunpack.c.h.b16 %v562
    %v1105 = vunpack.c.l.b16 %v563
    %v1106 = vunpack.c.h.b16 %v563
    %v1107 = vunpack.c.l.b16 %v564
    %v1108 = vunpack.c.h.b16 %v564
    %v1109 = vunpack.c.l.b16 %v565
    %v1110 = vunpack.c.h.b16 %v565
    %v1111 = vunpack.c.l.b16 %v566
    %v1112 = vunpack.c.h.b16 %v566
    %v1113 = vunpack.c.l.b16 %v567
    %v1114 = vunpack.c.h.b16 %v567
    %v1115 = vunpack.c.l.b16 %v568
    %v1116 = vunpack.c.h.b16 %v568
    %v1117 = vunpack.c.l.b16 %v569
    %v1118 = vunpack.c.h.b16 %v569
    %v1119 = vunpack.c.l.b16 %v570
    %v1120 = vunpack.c.h.b16 %v570
    %v1121 = vunpack.c.l.b16 %v571
    %v1122 = vunpack.c.h.b16 %v571
    %v1123 = vunpack.c.l.b16 %v572
    %v1124 = vunpack.c.h.b16 %v572
    %v1125 = vunpack.c.l.b16 %v573
    %v1126 = vunpack.c.h.b16 %v573
    %v1127 = vunpack.c.l.b16 %v574
    %v1128 = vunpack.c.h.b16 %v574
    %v1129 = vunpack.c.l.b16 %v575
    %v1130 = vunpack.c.h.b16 %v575
    %v1131 = vunpack.c.l.b16 %v576
    %v1132 = vunpack.c.h.b16 %v576
    %v1133 = vunpack.c.l.b16 %v577
    %v1134 = vunpack.c.h.b16 %v577
    %v1135 = vunpack.c.l.b16 %v578
    %v1136 = vunpack.c.h.b16 %v578
    %v1137 = vunpack.c.l.b16 %v579
    %v1138 = vunpack.c.h.b16 %v579
    %v1139 = vunpack.c.l.b16 %v580
    %v1140 = vunpack.c.h.b16 %v580
    %v1141 = vunpack.c.l.b16 %v581
    %v1142 = vunpack.c.h.b16 %v581
    %v1143 = vunpack.c.l.b16 %v582
    %v1144 = vunpack.c.h.b16 %v582
    %v1145 = vunpack.c.l.b16 %v583
    %v1146 = vunpack.c.h.b16 %v583
    %v1147 = vunpack.c.l.b16 %v584
    %v1148 = vunpack.c.h.b16 %v584
    %v1149 = vunpack.c.l.b16 %v585
    %v1150 = vunpack.c.h.b16 %v585
    %v1151 = vunpack.c.l.b16 %v586
    %v1152 = vunpack.c.h.b16 %v586
    %v1153 = vunpack.c.l.b16 %v587
    %v1154 = vunpack.c.h.b16 %v587
    %v1155 = vunpack.c.l.b16 %v588
    %v1156 = vunpack.c.h.b16 %v588
    %v1157 = vunpack.c.l.b16 %v589
    %v1158 = vunpack.c.h.b16 %v589
    %v1159 = vunpack.c.l.b16 %v590
    %v1160 = vunpack.c.h.b16 %v590
    %v1161 = vunpack.c.l.b16 %v591
    %v1162 = vunpack.c.h.b16 %v591
    %v1163 = vunpack.c.l.b16 %v592
    %v1164 = vunpack.c.h.b16 %v592
    %v1165 = vunpack.c.l.b16 %v593
    %v1166 = vunpack.c.h.b16 %v593
    %v1167 = vunpack.c.l.b16 %v594
    %v1168 = vunpack.c.h.b16 %v594
    %v1169 = vunpack.c.l.b16 %v595
    %v1170 = vunpack.c.h.b16 %v595
    %v1171 = vunpack.c.l.b16 %v596
    %v1172 = vunpack.c.h.b16 %v596
    %v1173 = vunpack.c.l.b16 %v597
    %v1174 = vunpack.c.h.b16 %v597
    %v1175 = vunpack.c.l.b16 %v598
    %v1176 = vunpack.c.h.b16 %v598
    %v1177 = vunpack.c.l.b16 %v599
    %v1178 = vunpack.c.h.b16 %v599
    %v1179 = vunpack.c.l.b16 %v600
    %v1180 = vunpack.c.h.b16 %v600
    %v1181 = vunpack.c.l.b16 %v601
    %v1182 = vunpack.c.h.b16 %v601
    %v1183 = vunpack.c.l.b16 %v602
    %v1184 = vunpack.c.h.b16 %v602
    %v1185 = vunpack.c.l.b16 %v603
    %v1186 = vunpack.c.h.b16 %v603
    %v1187 = vunpack.c.l.b16 %v604
    %v1188 = vunpack.c.h.b16 %v604
    %v1189 = vunpack.c.l.b16 %v605
    %v1190 = vunpack.c.h.b16 %v605
    %v1191 = vunpack.c.l.b16 %v606
    %v1192 = vunpack.c.h.b16 %v606
    %v1193 = vunpack.c.l.b16 %v607
    %v1194 = vunpack.c.h.b16 %v607
    %v1195 = vunpack.c.l.b16 %v608
    %v1196 = vunpack.c.h.b16 %v608
    %v1197 = vunpack.c.l.b16 %v609
    %v1198 = vunpack.c.h.b16 %v609
    %v1199 = vunpack.c.l.b16 %v610
    %v1200 = vunpack.c.h.b16 %v610
    %v1201 = vunpack.c.l.b16 %v611
    %v1202 = vunpack.c.h.b16 %v611
    %v1203 = vunpack.c.l.b16 %v612
    %v1204 = vunpack.c.h.b16 %v612
    %v1205 = vunpack.c.l.b16 %v613
    %v1206 = vunpack.c.h.b16 %v613
    %v1207 = vunpack.c.l.b16 %v614
    %v1208 = vunpack.c.h.b16 %v614
    %v1209 = vunpack.c.l.b16 %v615
    %v1210 = vunpack.c.h.b16 %v615
    %v1211 = vunpack.c.l.b16 %v616
    %v1212 = vunpack.c.h.b16 %v616
    %v1213 = vunpack.c.l.b16 %v617
    %v1214 = vunpack.c.h.b16 %v617
    %v1215 = vunpack.c.l.b16 %v618
    %v1216 = vunpack.c.h.b16 %v618
    %v1217 = vunpack.c.l.b16 %v619
    %v1218 = vunpack.c.h.b16 %v619
    %v1219 = vunpack.c.l.b16 %v620
    %v1220 = vunpack.c.h.b16 %v620
    %v1221 = vunpack.c.l.b16 %v621
    %v1222 = vunpack.c.h.b16 %v621
    %v1223 = vunpack.c.l.b16 %v622
    %v1224 = vunpack.c.h.b16 %v622
    %v1225 = vunpack.c.l.b16 %v623
    %v1226 = vunpack.c.h.b16 %v623
    %v1227 = vunpack.c.l.b16 %v624
    %v1228 = vunpack.c.h.b16 %v624
    %v1229 = vunpack.c.l.b16 %v625
    %v1230 = vunpack.c.h.b16 %v625
    %v1231 = vunpack.c.l.b16 %v626
    %v1232 = vunpack.c.h.b16 %v626
    %v1233 = vunpack.c.l.b16 %v627
    %v1234 = vunpack.c.h.b16 %v627
    %v1235 = vunpack.c.l.b16 %v628
    %v1236 = vunpack.c.h.b16 %v628
    %v1237 = vunpack.c.l.b16 %v629
    %v1238 = vunpack.c.h.b16 %v629
    %v1239 = vunpack.c.l.b16 %v630
    %v1240 = vunpack.c.h.b16 %v630
    %v1241 = vunpack.c.l.b16 %v631
    %v1242 = vunpack.c.h.b16 %v631
    %v1243 = vunpack.c.l.b16 %v632
    %v1244 = vunpack.c.h.b16 %v632
    %v1245 = vunpack.c.l.b16 %v633
    %v1246 = vunpack.c.h.b16 %v633
    %v1247 = vunpack.c.l.b16 %v634
    %v1248 = vunpack.c.h.b16 %v634
    %v1249 = vunpack.c.l.b16 %v635
    %v1250 = vunpack.c.h.b16 %v635
    %v1251 = vunpack.c.l.b16 %v636
    %v1252 = vunpack.c.h.b16 %v636
    %v1253 = vunpack.c.l.b16 %v637
    %v1254 = vunpack.c.h.b16 %v637
    %v1255 = vunpack.c.l.b16 %v638
    %v1256 = vunpack.c.h.b16 %v638
    %v1257 = vunpack.c.l.b16 %v639
    %v1258 = vunpack.c.h.b16 %v639
    %v1259 = vunpack.c.l.b16 %v640
    %v1260 = vunpack.c.h.b16 %v640
    %v1261 = vunpack.c.l.b16 %v641
    %v1262 = vunpack.c.h.b16 %v641
    %v1263 = vunpack.c.l.b16 %v642
    %v1264 = vunpack.c.h.b16 %v642
    %v1265 = vunpack.c.l.b16 %v643
    %v1266 = vunpack.c.h.b16 %v643
    %v1267 = vunpack.c.l.b16 %v644
    %v1268 = vunpack.c.h.b16 %v644
    %v1269 = vunpack.c.l.b16 %v645
    %v1270 = vunpack.c.h.b16 %v645
    %v1271 = vunpack.c.l.b16 %v646
    %v1272 = vunpack.c.h.b16 %v646
    %v1273 = vunpack.c.l.b16 %v647
    %v1274 = vunpack.c.h.b16 %v647
    %v1275 = vunpack.c.l.b16 %v648
    %v1276 = vunpack.c.h.b16 %v648
    %v1277 = vunpack.c.l.b16 %v649
    %v1278 = vunpack.c.h.b16 %v649
    %v1279 = vunpack.c.l.b16 %v650
    %v1280 = vunpack.c.h.b16 %v650
    %v1281 = vunpack.c.l.b16 %v651
    %v1282 = vunpack.c.h.b16 %v651
    %v1283 = vunpack.c.l.b16 %v652
    %v1284 = vunpack.c.h.b16 %v652
    %v1285 = vunpack.c.l.b16 %v653
    %v1286 = vunpack.c.h.b16 %v653
    %v1287 = vunpack.c.l.b16 %v654
    %v1288 = vunpack.c.h.b16 %v654
    %v1289 = vunpack.c.l.b16 %v655
    %v1290 = vunpack.c.h.b16 %v655
    %v1291 = vunpack.c.l.b16 %v656
    %v1292 = vunpack.c.h.b16 %v656
    %v1293 = vunpack.c.l.b16 %v657
    %v1294 = vunpack.c.h.b16 %v657
    %v1295 = vunpack.c.l.b16 %v658
    %v1296 = vunpack.c.h.b16 %v658
    %v1297 = vunpack.c.l.b16 %v659
    %v1298 = vunpack.c.h.b16 %v659
    %v1299 = vunpack.c.l.b16 %v660
    %v1300 = vunpack.c.h.b16 %v660
    %v1301 = vunpack.c.l.b16 %v661
    %v1302 = vunpack.c.h.b16 %v661
    %v1303 = vunpack.c.l.b16 %v662
    %v1304 = vunpack.c.h.b16 %v662
    %v1305 = vunpack.c.l.b16 %v663
    %v1306 = vunpack.c.h.b16 %v663
    %v1307 = vunpack.c.l.b16 %v664
    %v1308 = vunpack.c.h.b16 %v664
    %v1309 = vunpack.c.l.b16 %v665
    %v1310 = vunpack.c.h.b16 %v665
    %v1311 = vunpack.c.l.b16 %v666
    %v1312 = vunpack.c.h.b16 %v666
    %v1313 = vunpack.c.l.b16 %v667
    %v1314 = vunpack.c.h.b16 %v667
    %v1315 = vunpack.c.l.b16 %v668
    %v1316 = vunpack.c.h.b16 %v668
    %v1317 = vunpack.c.l.b16 %v669
    %v1318 = vunpack.c.h.b16 %v669
    %v1319 = vunpack.c.l.b16 %v670
    %v1320 = vunpack.c.h.b16 %v670
    %v1321 = vunpack.c.l.b16 %v671
    %v1322 = vunpack.c.h.b16 %v671
    %v1323 = vunpack.c.l.b16 %v672
    %v1324 = vunpack.c.h.b16 %v672
    %v1325 = vunpack.c.l.b16 %v673
    %v1326 = vunpack.c.h.b16 %v673
    %v1327 = vunpack.c.l.b16 %v674
    %v1328 = vunpack.c.h.b16 %v674
    %v1329 = vunpack.c.l.b16 %v675
    %v1330 = vunpack.c.h.b16 %v675
    %v1331 = vunpack.c.l.b16 %v676
    %v1332 = vunpack.c.h.b16 %v676
    %v1333 = vunpack.c.l.b16 %v677
    %v1334 = vunpack.c.h.b16 %v677
    %v1335 = vunpack.c.l.b16 %v678
    %v1336 = vunpack.c.h.b16 %v678
    %v1337 = vunpack.c.l.b16 %v679
    %v1338 = vunpack.c.h.b16 %v679
    %v1339 = vunpack.c.l.b16 %v680
    %v1340 = vunpack.c.h.b16 %v680
    %v1341 = vunpack.c.l.b16 %v681
    %v1342 = vunpack.c.h.b16 %v681
    %v1343 = vunpack.c.l.b16 %v682
    %v1344 = vunpack.c.h.b16 %v682
    %v1345 = vunpack.c.l.b16 %v683
    %v1346 = vunpack.c.h.b16 %v683
    %v1347 = vunpack.c.l.b16 %v684
    %v1348 = vunpack.c.h.b16 %v684
    %v1349 = vunpack.c.l.b16 %v685
    %v1350 = vunpack.c.h.b16 %v685
    %v1351 = vunpack.c.l.b16 %v686
    %v1352 = vunpack.c.h.b16 %v686
    %v1353 = vunpack.c.l.b16 %v687
    %v1354 = vunpack.c.h.b16 %v687
    %v1355 = vunpack.c.l.b16 %v688
    %v1356 = vunpack.c.h.b16 %v688
    %v1357 = vunpack.c.l.b16 %v689
    %v1358 = vunpack.c.h.b16 %v689
    %v1359 = vunpack.c.l.b16 %v690
    %v1360 = vunpack.c.h.b16 %v690
    %v1361 = vunpack.c.l.b16 %v691
    %v1362 = vunpack.c.h.b16 %v691
    %v1363 = vunpack.c.l.b16 %v692
    %v1364 = vunpack.c.h.b16 %v692
    %v1365 = vunpack.c.l.b16 %v693
    %v1366 = vunpack.c.h.b16 %v693
    %v1367 = vunpack.c.l.b16 %v694
    %v1368 = vunpack.c.h.b16 %v694
    %v1369 = vunpack.c.l.b16 %v695
    %v1370 = vunpack.c.h.b16 %v695
    %v1371 = vunpack.c.l.b16 %v696
    %v1372 = vunpack.c.h.b16 %v696
    %v1373 = vunpack.c.l.b16 %v697
    %v1374 = vunpack.c.h.b16 %v697
    %v1375 = vunpack.c.l.b16 %v698
    %v1376 = vunpack.c.h.b16 %v698
    %v1377 = vunpack.c.l.b16 %v699
    %v1378 = vunpack.c.h.b16 %v699
    %v1379 = vunpack.c.l.b16 %v700
    %v1380 = vunpack.c.h.b16 %v700
    %v1381 = vunpack.c.l.b16 %v701
    %v1382 = vunpack.c.h.b16 %v701
    %v1383 = vunpack.c.l.b16 %v702
    %v1384 = vunpack.c.h.b16 %v702
    %v1385 = vunpack.c.l.b16 %v703
    %v1386 = vunpack.c.h.b16 %v703
    %v1387 = vunpack.c.l.b16 %v704
    %v1388 = vunpack.c.h.b16 %v704
    %v1389 = vunpack.c.l.b16 %v705
    %v1390 = vunpack.c.h.b16 %v705
    %v1391 = vunpack.c.l.b16 %v706
    %v1392 = vunpack.c.h.b16 %v706
    %v1393 = vunpack.c.l.b16 %v707
    %v1394 = vunpack.c.h.b16 %v707
    %v1395 = vunpack.c.l.b16 %v708
    %v1396 = vunpack.c.h.b16 %v708
    %v1397 = vunpack.c.l.b16 %v709
    %v1398 = vunpack.c.h.b16 %v709
    %v1399 = vunpack.c.l.b16 %v710
    %v1400 = vunpack.c.h.b16 %v710
    %v1401 = vunpack.c.l.b16 %v711
    %v1402 = vunpack.c.h.b16 %v711
    %v1403 = vunpack.c.l.b16 %v712
    %v1404 = vunpack.c.h.b16 %v712
    %v1405 = vunpack.c.l.b16 %v713
    %v1406 = vunpack.c.h.b16 %v713
    %v1407 = vunpack.c.l.b16 %v714
    %v1408 = vunpack.c.h.b16 %v714
    %v1409 = vunpack.c.l.b16 %v715
    %v1410 = vunpack.c.h.b16 %v715
    %v1411 = vunpack.c.l.b16 %v716
    %v1412 = vunpack.c.h.b16 %v716
    %v1413 = vunpack.c.l.b16 %v717
    %v1414 = vunpack.c.h.b16 %v717
    %v1415 = vunpack.c.l.b16 %v718
    %v1416 = vunpack.c.h.b16 %v718
    %v1417 = vunpack.c.l.b16 %v719
    %v1418 = vunpack.c.h.b16 %v719
    %v1419 = vunpack.c.l.b16 %v720
    %v1420 = vunpack.c.h.b16 %v720
    %v1421 = vunpack.c.l.b16 %v721
    %v1422 = vunpack.c.h.b16 %v721
    %v1423 = vunpack.c.l.b16 %v722
    %v1424 = vunpack.c.h.b16 %v722
    %v1425 = vunpack.c.l.b16 %v723
    %v1426 = vunpack.c.h.b16 %v723
    %v1427 = vunpack.c.l.b16 %v724
    %v1428 = vunpack.c.h.b16 %v724
    %v1429 = vunpack.c.l.b16 %v725
    %v1430 = vunpack.c.h.b16 %v725
    %v1431 = vunpack.c.l.b16 %v726
    %v1432 = vunpack.c.h.b16 %v726
    %v1433 = vunpack.c.l.b16 %v727
    %v1434 = vunpack.c.h.b16 %v727
    %v1435 = vunpack.c.l.b16 %v728
    %v1436 = vunpack.c.h.b16 %v728
    %v1437 = vunpack.c.l.b16 %v729
    %v1438 = vunpack.c.h.b16 %v729
    %v1439 = vunpack.c.l.b16 %v730
    %v1440 = vunpack.c.h.b16 %v730
    %v1441 = vunpack.c.l.b16 %v731
    %v1442 = vunpack.c.h.b16 %v731
    %v1443 = vunpack.c.l.b16 %v732
    %v1444 = vunpack.c.h.b16 %v732
    %v1445 = vunpack.c.l.b16 %v733
    %v1446 = vunpack.c.h.b16 %v733
    %v1447 = vunpack.c.l.b16 %v734
    %v1448 = vunpack.c.h.b16 %v734
    %v1449 = vunpack.c.l.b16 %v735
    %v1450 = vunpack.c.h.b16 %v735
    %v1451 = vunpack.c.l.b16 %v736
    %v1452 = vunpack.c.h.b16 %v736
    %v1453 = vunpack.c.l.b16 %v737
    %v1454 = vunpack.c.h.b16 %v737
    %v1455 = vunpack.c.l.b16 %v738
    %v1456 = vunpack.c.h.b16 %v738
    %v1457 = vunpack.c.l.b16 %v739
    %v1458 = vunpack.c.h.b16 %v739
    %v1459 = vunpack.c.l.b16 %v740
    %v1460 = vunpack.c.h.b16 %v740
    %v1461 = vunpack.c.l.b16 %v741
    %v1462 = vunpack.c.h.b16 %v741
    %v1463 = vunpack.c.l.b16 %v742
    %v1464 = vunpack.c.h.b16 %v742
    %v1465 = vunpack.c.l.b16 %v743
    %v1466 = vunpack.c.h.b16 %v743
    %v1467 = vunpack.c.l.b16 %v744
    %v1468 = vunpack.c.h.b16 %v744
    %v1469 = vunpack.c.l.b16 %v745
    %v1470 = vunpack.c.h.b16 %v745
    %v1471 = vunpack.c.l.b16 %v746
    %v1472 = vunpack.c.h.b16 %v746
    %v1473 = vunpack.c.l.b16 %v747
    %v1474 = vunpack.c.h.b16 %v747
    %v1475 = vunpack.c.l.b16 %v748
    %v1476 = vunpack.c.h.b16 %v748
    %v1477 = vunpack.c.l.b16 %v749
    %v1478 = vunpack.c.h.b16 %v749
    %v1479 = vunpack.c.l.b16 %v750
    %v1480 = vunpack.c.h.b16 %v750
    %v1481 = vunpack.c.l.b16 %v751
    %v1482 = vunpack.c.h.b16 %v751
    %v1483 = vunpack.c.l.b16 %v752
    %v1484 = vunpack.c.h.b16 %v752
    %v1485 = vunpack.c.l.b16 %v753
    %v1486 = vunpack.c.h.b16 %v753
    %v1487 = vunpack.c.l.b16 %v754
    %v1488 = vunpack.c.h.b16 %v754
    %v1489 = vunpack.c.l.b16 %v755
    %v1490 = vunpack.c.h.b16 %v755
    %v1491 = vunpack.c.l.b16 %v756
    %v1492 = vunpack.c.h.b16 %v756
    %v1493 = vunpack.c.l.b16 %v757
    %v1494 = vunpack.c.h.b16 %v757
    %v1495 = vunpack.c.l.b16 %v758
    %v1496 = vunpack.c.h.b16 %v758
    %v1497 = vunpack.c.l.b16 %v759
    %v1498 = vunpack.c.h.b16 %v759
    %v1499 = vunpack.c.l.b16 %v760
    %v1500 = vunpack.c.h.b16 %v760
    %v1501 = vunpack.c.l.b16 %v761
    %v1502 = vunpack.c.h.b16 %v761
    %v1503 = vunpack.c.l.b16 %v762
    %v1504 = vunpack.c.h.b16 %v762
    %v1505 = vunpack.c.l.b16 %v763
    %v1506 = vunpack.c.h.b16 %v763
    %v1507 = vunpack.c.l.b16 %v764
    %v1508 = vunpack.c.h.b16 %v764
    %v1509 = vunpack.c.l.b16 %v765
    %v1510 = vunpack.c.h.b16 %v765
    %v1511 = vunpack.c.l.b16 %v766
    %v1512 = vunpack.c.h.b16 %v766
    %v1513 = vunpack.c.l.b16 %v767
    %v1514 = vunpack.c.h.b16 %v767
    %v1515 = vunpack.c.l.b16 %v768
    %v1516 = vunpack.c.h.b16 %v768
    %v1517 = vunpack.c.l.b16 %v769
    %v1518 = vunpack.c.h.b16 %v769
    %v1519 = vunpack.c.l.b16 %v770
    %v1520 = vunpack.c.h.b16 %v770
    %v1521 = vunpack.c.l.b16 %v771
    %v1522 = vunpack.c.h.b16 %v771
    %v1523 = vunpack.c.l.b16 %v772
    %v1524 = vunpack.c.h.b16 %v772
    %v1525 = vunpack.c.l.b16 %v773
    %v1526 = vunpack.c.h.b16 %v773
    %v1527 = vunpack.c.l.b16 %v774
    %v1528 = vunpack.c.h.b16 %v774
    %v1529 = vunpack.c.l.b16 %v775
    %v1530 = vunpack.c.h.b16 %v775
    %v1531 = vunpack.c.l.b16 %v776
    %v1532 = vunpack.c.h.b16 %v776
    %v1533 = vunpack.c.l.b16 %v777
    %v1534 = vunpack.c.h.b16 %v777
    %v1535 = vunpack.c.l.b16 %v778
    %v1536 = vunpack.c.h.b16 %v778
    %v1537 = vunpack.c.l.b16 %v779
    %v1538 = vunpack.c.h.b16 %v779
    %v1539 = vunpack.c.l.b16 %v780
    %v1540 = vunpack.c.h.b16 %v780
    %v1541 = vunpack.c.l.b16 %v781
    %v1542 = vunpack.c.h.b16 %v781
    %v1543 = vunpack.c.l.b16 %v782
    %v1544 = vunpack.c.h.b16 %v782
    %v1545 = vunpack.c.l.b16 %v783
    %v1546 = vunpack.c.h.b16 %v783
    %v1547 = vunpack.c.l.b16 %v784
    %v1548 = vunpack.c.h.b16 %v784
    %v1549 = vunpack.c.l.b16 %v785
    %v1550 = vunpack.c.h.b16 %v785
    %v1551 = vunpack.c.l.b16 %v786
    %v1552 = vunpack.c.h.b16 %v786
    %v1553 = vunpack.c.l.b16 %v787
    %v1554 = vunpack.c.h.b16 %v787
    %v1555 = vunpack.c.l.b16 %v788
    %v1556 = vunpack.c.h.b16 %v788
    %v1557 = vunpack.c.l.b16 %v789
    %v1558 = vunpack.c.h.b16 %v789
    %v1559 = vunpack.c.l.b16 %v790
    %v1560 = vunpack.c.h.b16 %v790
    %v1561 = vunpack.c.l.b16 %v791
    %v1562 = vunpack.c.h.b16 %v791
    %v1563 = vunpack.c.l.b16 %v792
    %v1564 = vunpack.c.h.b16 %v792
    %v1565 = vunpack.c.l.b16 %v793
    %v1566 = vunpack.c.h.b16 %v793
    %v1567 = vunpack.c.l.b16 %v794
    %v1568 = vunpack.c.h.b16 %v794
    %v1569 = vunpack.c.l.b16 %v795
    %v1570 = vunpack.c.h.b16 %v795
    %v1571 = vunpack.c.l.b16 %v796
    %v1572 = vunpack.c.h.b16 %v796
    %v1573 = vunpack.c.l.b16 %v797
    %v1574 = vunpack.c.h.b16 %v797
    %v1575 = vunpack.c.l.b16 %v798
    %v1576 = vunpack.c.h.b16 %v798
    %v1577 = vunpack.c.l.b16 %v799
    %v1578 = vunpack.c.h.b16 %v799
    %v1579 = vunpack.c.l.b16 %v800
    %v1580 = vunpack.c.h.b16 %v800
    %v1581 = vunpack.c.l.b16 %v801
    %v1582 = vunpack.c.h.b16 %v801
    %v1583 = vunpack.c.l.b16 %v802
    %v1584 = vunpack.c.h.b16 %v802
    %v1585 = vunpack.c.l.b16 %v803
    %v1586 = vunpack.c.h.b16 %v803
    %v1587 = vunpack.c.l.b16 %v804
    %v1588 = vunpack.c.h.b16 %v804
    %v1589 = vunpack.c.l.b16 %v805
    %v1590 = vunpack.c.h.b16 %v805
    %v1591 = vunpack.c.l.b16 %v806
    %v1592 = vunpack.c.h.b16 %v806
    %v1593 = vunpack.c.l.b16 %v807
    %v1594 = vunpack.c.h.b16 %v807
    %v1595 = vunpack.c.l.b16 %v808
    %v1596 = vunpack.c.h.b16 %v808
    %v1597 = vunpack.c.l.b16 %v809
    %v1598 = vunpack.c.h.b16 %v809
    %v1599 = vunpack.c.l.b16 %v810
    %v1600 = vunpack.c.h.b16 %v810
    %v1601 = vpack.c.b16 %v1093, %v1089
    %v1602 = vpack.c.b16 %v1094, %v1090
    %v1603 = vpack.c.b16 %v1095, %v1091
    %v1604 = vpack.c.b16 %v1096, %v1092
    %v1605 = vpack.c.b16 %v1101, %v1097
    %v1606 = vpack.c.b16 %v1102, %v1098
    %v1607 = vpack.c.b16 %v1103, %v1099
    %v1608 = vpack.c.b16 %v1104, %v1100
    %v1609 = vpack.c.b16 %v1109, %v1105
    %v1610 = vpack.c.b16 %v1110, %v1106
    %v1611 = vpack.c.b16 %v1111, %v1107
    %v1612 = vpack.c.b16 %v1112, %v1108
    %v1613 = vpack.c.b16 %v1117, %v1113
    %v1614 = vpack.c.b16 %v1118, %v1114
    %v1615 = vpack.c.b16 %v1119, %v1115
    %v1616 = vpack.c.b16 %v1120, %v1116
    %v1617 = vpack.c.b16 %v1125, %v1121
    %v1618 = vpack.c.b16 %v1126, %v1122
    %v1619 = vpack.c.b16 %v1127, %v1123
    %v1620 = vpack.c.b16 %v1128, %v1124
    %v1621 = vpack.c.b16 %v1133, %v1129
    %v1622 = vpack.c.b16 %v1134, %v1130
    %v1623 = vpack.c.b16 %v1135, %v1131
    %v1624 = vpack.c.b16 %v1136, %v1132
    %v1625 = vpack.c.b16 %v1141, %v1137
    %v1626 = vpack.c.b16 %v1142, %v1138
    %v1627 = vpack.c.b16 %v1143, %v1139
    %v1628 = vpack.c.b16 %v1144, %v1140
    %v1629 = vpack.c.b16 %v1149, %v1145
    %v1630 = vpack.c.b16 %v1150, %v1146
    %v1631 = vpack.c.b16 %v1151, %v1147
    %v1632 = vpack.c.b16 %v1152, %v1148
    %v1633 = vpack.c.b16 %v1157, %v1153
    %v1634 = vpack.c.b16 %v1158, %v1154
    %v1635 = vpack.c.b16 %v1159, %v1155
    %v1636 = vpack.c.b16 %v1160, %v1156
    %v1637 = vpack.c.b16 %v1165, %v1161
    %v1638 = vpack.c.b16 %v1166, %v1162
    %v1639 = vpack.c.b16 %v1167, %v1163
    %v1640 = vpack.c.b16 %v1168, %v1164
    %v1641 = vpack.c.b16 %v1173, %v1169
    %v1642 = vpack.c.b16 %v1174, %v1170
    %v1643 = vpack.c.b16 %v1175, %v1171
    %v1644 = vpack.c.b16 %v1176, %v1172
    %v1645 = vpack.c.b16 %v1181, %v1177
    %v1646 = vpack.c.b16 %v1182, %v1178
    %v1647 = vpack.c.b16 %v1183, %v1179
    %v1648 = vpack.c.b16 %v1184, %v1180
    %v1649 = vpack.c.b16 %v1189, %v1185
    %v1650 = vpack.c.b16 %v1190, %v1186
    %v1651 = vpack.c.b16 %v1191, %v1187
    %v1652 = vpack.c.b16 %v1192, %v1188
    %v1653 = vpack.c.b16 %v1197, %v1193
    %v1654 = vpack.c.b16 %v1198, %v1194
    %v1655 = vpack.c.b16 %v1199, %v1195
    %v1656 = vpack.c.b16 %v1200, %v1196
    %v1657 = vpack.c.b16 %v1205, %v1201
    %v1658 = vpack.c.b16 %v1206, %v1202
    %v1659 = vpack.c.b16 %v1207, %v1203
    %v1660 = vpack.c.b16 %v1208, %v1204
    %v1661 = vpack.c.b16 %v1213, %v1209
    %v1662 = vpack.c.b16 %v1214, %v1210
    %v1663 = vpack.c.b16 %v1215, %v1211
    %v1664 = vpack.c.b16 %v1216, %v1212
    %v1665 = vpack.c.b16 %v1221, %v1217
    %v1666 = vpack.c.b16 %v1222, %v1218
    %v1667 = vpack.c.b16 %v1223, %v1219
    %v1668 = vpack.c.b16 %v1224, %v1220
    %v1669 = vpack.c.b16 %v1229, %v1225
    %v1670 = vpack.c.b16 %v1230, %v1226
    %v1671 = vpack.c.b16 %v1231, %v1227
    %v1672 = vpack.c.b16 %v1232, %v1228
    %v1673 = vpack.c.b16 %v1237, %v1233
    %v1674 = vpack.c.b16 %v1238, %v1234
    %v1675 = vpack.c.b16 %v1239, %v1235
    %v1676 = vpack.c.b16 %v1240, %v1236
    %v1677 = vpack.c.b16 %v1245, %v1241
    %v1678 = vpack.c.b16 %v1246, %v1242
    %v1679 = vpack.c.b16 %v1247, %v1243
    %v1680 = vpack.c.b16 %v1248, %v1244
    %v1681 = vpack.c.b16 %v1253, %v1249
    %v1682 = vpack.c.b16 %v1254, %v1250
    %v1683 = vpack.c.b16 %v1255, %v1251
    %v1684 = vpack.c.b16 %v1256, %v1252
    %v1685 = vpack.c.b16 %v1261, %v1257
    %v1686 = vpack.c.b16 %v1262, %v1258
    %v1687 = vpack.c.b16 %v1263, %v1259
    %v1688 = vpack.c.b16 %v1264, %v1260
    %v1689 = vpack.c.b16 %v1269, %v1265
    %v1690 = vpack.c.b16 %v1270, %v1266
    %v1691 = vpack.c.b16 %v1271, %v1267
    %v1692 = vpack.c.b16 %v1272, %v1268
    %v1693 = vpack.c.b16 %v1277, %v1273
    %v1694 = vpack.c.b16 %v1278, %v1274
    %v1695 = vpack.c.b16 %v1279, %v1275
    %v1696 = vpack.c.b16 %v1280, %v1276
    %v1697 = vpack.c.b16 %v1285, %v1281
    %v1698 = vpack.c.b16 %v1286, %v1282
    %v1699 = vpack.c.b16 %v1287, %v1283
    %v1700 = vpack.c.b16 %v1288, %v1284
    %v1701 = vpack.c.b16 %v1293, %v1289
    %v1702 = vpack.c.b16 %v1294, %v1290
    %v1703 = vpack.c.b16 %v1295, %v1291
    %v1704 = vpack.c.b16 %v1296, %v1292
    %v1705 = vpack.c.b16 %v1301, %v1297
    %v1706 = vpack.c.b16 %v1302, %v1298
    %v1707 = vpack.c.b16 %v1303, %v1299
    %v1708 = vpack.c.b16 %v1304, %v1300
    %v1709 = vpack.c.b16 %v1309, %v1305
    %v1710 = vpack.c.b16 %v1310, %v1306
    %v1711 = vpack.c.b16 %v1311, %v1307
    %v1712 = vpack.c.b16 %v1312, %v1308
    %v1713 = vpack.c.b16 %v1317, %v1313
    %v1714 = vpack.c.b16 %v1318, %v1314
    %v1715 = vpack.c.b16 %v1319, %v1315
    %v1716 = vpack.c.b16 %v1320, %v1316
    %v1717 = vpack.c.b16 %v1325, %v1321
    %v1718 = vpack.c.b16 %v1326, %v1322
    %v1719 = vpack.c.b16 %v1327, %v1323
    %v1720 = vpack.c.b16 %v1328, %v1324
    %v1721 = vpack.c.b16 %v1333, %v1329
    %v1722 = vpack.c.b16 %v1334, %v1330
    %v1723 = vpack.c.b16 %v1335, %v1331
    %v1724 = vpack.c.b16 %v1336, %v1332
    %v1725 = vpack.c.b16 %v1341, %v1337
    %v1726 = vpack.c.b16 %v1342, %v1338
    %v1727 = vpack.c.b16 %v1343, %v1339
    %v1728 = vpack.c.b16 %v1344, %v1340
    %v1729 = vpack.c.b16 %v1349, %v1345
    %v1730 = vpack.c.b16 %v1350, %v1346
    %v1731 = vpack.c.b16 %v1351, %v1347
    %v1732 = vpack.c.b16 %v1352, %v1348
    %v1733 = vpack.c.b16 %v1357, %v1353
    %v1734 = vpack.c.b16 %v1358, %v1354
    %v1735 = vpack.c.b16 %v1359, %v1355
    %v1736 = vpack.c.b16 %v1360, %v1356
    %v1737 = vpack.c.b16 %v1365, %v1361
    %v1738 = vpack.c.b16 %v1366, %v1362
    %v1739 = vpack.c.b16 %v1367, %v1363
    %v1740 = vpack.c.b16 %v1368, %v1364
    %v1741 = vpack.c.b16 %v1373, %v1369
    %v1742 = vpack.c.b16 %v1374, %v1370
    %v1743 = vpack.c.b16 %v1375, %v1371
    %v1744 = vpack.c.b16 %v1376, %v1372
    %v1745 = vpack.c.b16 %v1381, %v1377
    %v1746 = vpack.c.b16 %v1382, %v1378
    %v1747 = vpack.c.b16 %v1383, %v1379
    %v1748 = vpack.c.b16 %v1384, %v1380
    %v1749 = vpack.c.b16 %v1389, %v1385
    %v1750 = vpack.c.b16 %v1390, %v1386
    %v1751 = vpack.c.b16 %v1391, %v1387
    %v1752 = vpack.c.b16 %v1392, %v1388
    %v1753 = vpack.c.b16 %v1397, %v1393
    %v1754 = vpack.c.b16 %v1398, %v1394
    %v1755 = vpack.c.b16 %v1399, %v1395
    %v1756 = vpack.c.b16 %v1400, %v1396
    %v1757 = vpack.c.b16 %v1405, %v1401
    %v1758 = vpack.c.b16 %v1406, %v1402
    %v1759 = vpack.c.b16 %v1407, %v1403
    %v1760 = vpack.c.b16 %v1408, %v1404
    %v1761 = vpack.c.b16 %v1413, %v1409
    %v1762 = vpack.c.b16 %v1414, %v1410
    %v1763 = vpack.c.b16 %v1415, %v1411
    %v1764 = vpack.c.b16 %v1416, %v1412
    %v1765 = vpack.c.b16 %v1421, %v1417
    %v1766 = vpack.c.b16 %v1422, %v1418
    %v1767 = vpack.c.b16 %v1423, %v1419
    %v1768 = vpack.c.b16 %v1424, %v1420
    %v1769 = vpack.c.b16 %v1429, %v1425
    %v1770 = vpack.c.b16 %v1430, %v1426
    %v1771 = vpack.c.b16 %v1431, %v1427
    %v1772 = vpack.c.b16 %v1432, %v1428
    %v1773 = vpack.c.b16 %v1437, %v1433
    %v1774 = vpack.c.b16 %v1438, %v1434
    %v1775 = vpack.c.b16 %v1439, %v1435
    %v1776 = vpack.c.b16 %v1440, %v1436
    %v1777 = vpack.c.b16 %v1445, %v1441
    %v1778 = vpack.c.b16 %v1446, %v1442
    %v1779 = vpack.c.b16 %v1447, %v1443
    %v1780 = vpack.c.b16 %v1448, %v1444
    %v1781 = vpack.c.b16 %v1453, %v1449
    %v1782 = vpack.c.b16 %v1454, %v1450
    %v1783 = vpack.c.b16 %v1455, %v1451
    %v1784 = vpack.c.b16 %v1456, %v1452
    %v1785 = vpack.c.b16 %v1461, %v1457
    %v1786 = vpack.c.b16 %v1462, %v1458
    %v1787 = vpack.c.b16 %v1463, %v1459
    %v1788 = vpack.c.b16 %v1464, %v1460
    %v1789 = vpack.c.b16 %v1469, %v1465
    %v1790 = vpack.c.b16 %v1470, %v1466
    %v1791 = vpack.c.b16 %v1471, %v1467
    %v1792 = vpack.c.b16 %v1472, %v1468
    %v1793 = vpack.c.b16 %v1477, %v1473
    %v1794 = vpack.c.b16 %v1478, %v1474
    %v1795 = vpack.c.b16 %v1479, %v1475
    %v1796 = vpack.c.b16 %v1480, %v1476
    %v1797 = vpack.c.b16 %v1485, %v1481
    %v1798 = vpack.c.b16 %v1486, %v1482
    %v1799 = vpack.c.b16 %v1487, %v1483
    %v1800 = vpack.c.b16 %v1488, %v1484
    %v1801 = vpack.c.b16 %v1493, %v1489
    %v1802 = vpack.c.b16 %v1494, %v1490
    %v1803 = vpack.c.b16 %v1495, %v1491
    %v1804 = vpack.c.b16 %v1496, %v1492
    %v1805 = vpack.c.b16 %v1501, %v1497
    %v1806 = vpack.c.b16 %v1502, %v1498
    %v1807 = vpack.c.b16 %v1503, %v1499
    %v1808 = vpack.c.b16 %v1504, %v1500
    %v1809 = vpack.c.b16 %v1509, %v1505
    %v1810 = vpack.c.b16 %v1510, %v1506
    %v1811 = vpack.c.b16 %v1511, %v1507
    %v1812 = vpack.c.b16 %v1512, %v1508
    %v1813 = vpack.c.b16 %v1517, %v1513
    %v1814 = vpack.c.b16 %v1518, %v1514
    %v1815 = vpack.c.b16 %v1519, %v1515
    %v1816 = vpack.c.b16 %v1520, %v1516
    %v1817 = vpack.c.b16 %v1525, %v1521
    %v1818 = vpack.c.b16 %v1526, %v1522
    %v1819 = vpack.c.b16 %v1527, %v1523
    %v1820 = vpack.c.b16 %v1528, %v1524
    %v1821 = vpack.c.b16 %v1533, %v1529
    %v1822 = vpack.c.b16 %v1534, %v1530
    %v1823 = vpack.c.b16 %v1535, %v1531
    %v1824 = vpack.c.b16 %v1536, %v1532
    %v1825 = vpack.c.b16 %v1541, %v1537
    %v1826 = vpack.c.b16 %v1542, %v1538
    %v1827 = vpack.c.b16 %v1543, %v1539
    %v1828 = vpack.c.b16 %v1544, %v1540
    %v1829 = vpack.c.b16 %v1549, %v1545
    %v1830 = vpack.c.b16 %v1550, %v1546
    %v1831 = vpack.c.b16 %v1551, %v1547
    %v1832 = vpack.c.b16 %v1552, %v1548
    %v1833 = vpack.c.b16 %v1557, %v1553
    %v1834 = vpack.c.b16 %v1558, %v1554
    %v1835 = vpack.c.b16 %v1559, %v1555
    %v1836 = vpack.c.b16 %v1560, %v1556
    %v1837 = vpack.c.b16 %v1565, %v1561
    %v1838 = vpack.c.b16 %v1566, %v1562
    %v1839 = vpack.c.b16 %v1567, %v1563
    %v1840 = vpack.c.b16 %v1568, %v1564
    %v1841 = vpack.c.b16 %v1573, %v1569
    %v1842 = vpack.c.b16 %v1574, %v1570
    %v1843 = vpack.c.b16 %v1575, %v1571
    %v1844 = vpack.c.b16 %v1576, %v1572
    %v1845 = vpack.c.b16 %v1581, %v1577
    %v1846 = vpack.c.b16 %v1582, %v1578
    %v1847 = vpack.c.b16 %v1583, %v1579
    %v1848 = vpack.c.b16 %v1584, %v1580
    %v1849 = vpack.c.b16 %v1589, %v1585
    %v1850 = vpack.c.b16 %v1590, %v1586
    %v1851 = vpack.c.b16 %v1591, %v1587
    %v1852 = vpack.c.b16 %v1592, %v1588
    %v1853 = vpack.c.b16 %v1597, %v1593
    %v1854 = vpack.c.b16 %v1598, %v1594
    %v1855 = vpack.c.b16 %v1599, %v1595
    %v1856 = vpack.c.b16 %v1600, %v1596
    %2113 = vmatprep.subr.bf16.mxu0 %v1602
    %2114 = vmatpush1.bf16.msra.mxu0 %v1601
    %2115 = vmatprep.subr.bf16.mxu0 %v1606
    %2116 = vmatpush1.bf16.msra.mxu0 %v1605
    %2117 = vmatprep.subr.bf16.mxu0 %v1610
    %2118 = vmatpush1.bf16.msra.mxu0 %v1609
    %2119 = vmatprep.subr.bf16.mxu0 %v1614
    %2120 = vmatpush1.bf16.msra.mxu0 %v1613
    %2121 = vmatprep.subr.bf16.mxu0 %v1618
    %2122 = vmatpush1.bf16.msra.mxu0 %v1617
    %2123 = vmatprep.subr.bf16.mxu0 %v1622
    %2124 = vmatpush1.bf16.msra.mxu0 %v1621
    %2125 = vmatprep.subr.bf16.mxu0 %v1626
    %2126 = vmatpush1.bf16.msra.mxu0 %v1625
    %2127 = vmatprep.subr.bf16.mxu0 %v1630
    %2128 = vmatpush1.bf16.msra.mxu0 %v1629
    %2129 = vmatprep.subr.bf16.mxu0 %v1634
    %2130 = vmatpush1.bf16.msra.mxu0 %v1633
    %2131 = vmatprep.subr.bf16.mxu0 %v1638
    %2132 = vmatpush1.bf16.msra.mxu0 %v1637
    %2133 = vmatprep.subr.bf16.mxu0 %v1642
    %2134 = vmatpush1.bf16.msra.mxu0 %v1641
    %2135 = vmatprep.subr.bf16.mxu0 %v1646
    %2136 = vmatpush1.bf16.msra.mxu0 %v1645
    %2137 = vmatprep.subr.bf16.mxu0 %v1650
    %2138 = vmatpush1.bf16.msra.mxu0 %v1649
    %2139 = vmatprep.subr.bf16.mxu0 %v1654
    %2140 = vmatpush1.bf16.msra.mxu0 %v1653
    %2141 = vmatprep.subr.bf16.mxu0 %v1658
    %2142 = vmatpush1.bf16.msra.mxu0 %v1657
    %2143 = vmatprep.subr.bf16.mxu0 %v1662
    %2144 = vmatpush1.bf16.msra.mxu0 %v1661
    %2145 = vmatprep.mubr.bf16.mxu0 %v548
    %2146 = vmatmul.mubr.bf16.gmra.mrb[0].mxu0 %v547
    %v2147 = vpop.f32.mrb[0].mxu0
    %v2148 = vadd.f32 %v816, %v2147
    %v2149 = vpop.f32.mrb[0].mxu0
    %v2150 = vadd.f32 %v820, %v2149
    %v2151 = vpop.f32.mrb[0].mxu0
    %v2152 = vadd.f32 %v816, %v2151
    %v2153 = vpop.f32.mrb[0].mxu0
    %v2154 = vadd.f32 %v820, %v2153
    %2155 = vdwg.mxu0
    %2156 = vmatprep.subr.bf16.mxu0 %v1666
    %2157 = vmatpush1.bf16.msra.mxu0 %v1665
    %2158 = vmatprep.subr.bf16.mxu0 %v1670
    %2159 = vmatpush1.bf16.msra.mxu0 %v1669
    %2160 = vmatprep.subr.bf16.mxu0 %v1674
    %2161 = vmatpush1.bf16.msra.mxu0 %v1673
    %2162 = vmatprep.subr.bf16.mxu0 %v1678
    %2163 = vmatpush1.bf16.msra.mxu0 %v1677
    %2164 = vmatprep.subr.bf16.mxu0 %v1682
    %2165 = vmatpush1.bf16.msra.mxu0 %v1681
    %2166 = vmatprep.subr.bf16.mxu0 %v1686
    %2167 = vmatpush1.bf16.msra.mxu0 %v1685
    %2168 = vmatprep.subr.bf16.mxu0 %v1690
    %2169 = vmatpush1.bf16.msra.mxu0 %v1689
    %2170 = vmatprep.subr.bf16.mxu0 %v1694
    %2171 = vmatpush1.bf16.msra.mxu0 %v1693
    %2172 = vmatprep.subr.bf16.mxu0 %v1698
    %2173 = vmatpush1.bf16.msra.mxu0 %v1697
    %2174 = vmatprep.subr.bf16.mxu0 %v1702
    %2175 = vmatpush1.bf16.msra.mxu0 %v1701
    %2176 = vmatprep.subr.bf16.mxu0 %v1706
    %2177 = vmatpush1.bf16.msra.mxu0 %v1705
    %2178 = vmatprep.subr.bf16.mxu0 %v1710
    %2179 = vmatpush1.bf16.msra.mxu0 %v1709
    %2180 = vmatprep.subr.bf16.mxu0 %v1714
    %2181 = vmatpush1.bf16.msra.mxu0 %v1713
    %2182 = vmatprep.subr.bf16.mxu0 %v1718
    %2183 = vmatpush1.bf16.msra.mxu0 %v1717
    %2184 = vmatprep.subr.bf16.mxu0 %v1722
    %2185 = vmatpush1.bf16.msra.mxu0 %v1721
    %2186 = vmatprep.subr.bf16.mxu0 %v1726
    %2187 = vmatpush1.bf16.msra.mxu0 %v1725
    %2188 = vmatprep.mubr.bf16.mxu0 %v550
    %2189 = vmatmul.mubr.bf16.gmra.mrb[0].mxu0 %v549
    %v2190 = vpop.f32.mrb[0].mxu0
    %v2191 = vadd.f32 %v2148, %v2190
    %v2192 = vpop.f32.mrb[0].mxu0
    %v2193 = vadd.f32 %v2150, %v2192
    %v2194 = vpop.f32.mrb[0].mxu0
    %v2195 = vadd.f32 %v2152, %v2194
    %v2196 = vpop.f32.mrb[0].mxu0
    %v2197 = vadd.f32 %v2154, %v2196
    %2198 = vdwg.mxu0
    %2199 = vmatprep.subr.bf16.mxu0 %v1730
    %2200 = vmatpush1.bf16.msra.mxu0 %v1729
    %2201 = vmatprep.subr.bf16.mxu0 %v1734
    %2202 = vmatpush1.bf16.msra.mxu0 %v1733
    %2203 = vmatprep.subr.bf16.mxu0 %v1738
    %2204 = vmatpush1.bf16.msra.mxu0 %v1737
    %2205 = vmatprep.subr.bf16.mxu0 %v1742
    %2206 = vmatpush1.bf16.msra.mxu0 %v1741
    %2207 = vmatprep.subr.bf16.mxu0 %v1746
    %2208 = vmatpush1.bf16.msra.mxu0 %v1745
    %2209 = vmatprep.subr.bf16.mxu0 %v1750
    %2210 = vmatpush1.bf16.msra.mxu0 %v1749
    %2211 = vmatprep.subr.bf16.mxu0 %v1754
    %2212 = vmatpush1.bf16.msra.mxu0 %v1753
    %2213 = vmatprep.subr.bf16.mxu0 %v1758
    %2214 = vmatpush1.bf16.msra.mxu0 %v1757
    %2215 = vmatprep.subr.bf16.mxu0 %v1762
    %2216 = vmatpush1.bf16.msra.mxu0 %v1761
    %2217 = vmatprep.subr.bf16.mxu0 %v1766
    %2218 = vmatpush1.bf16.msra.mxu0 %v1765
    %2219 = vmatprep.subr.bf16.mxu0 %v1770
    %2220 = vmatpush1.bf16.msra.mxu0 %v1769
    %2221 = vmatprep.subr.bf16.mxu0 %v1774
    %2222 = vmatpush1.bf16.msra.mxu0 %v1773
    %2223 = vmatprep.subr.bf16.mxu0 %v1778
    %2224 = vmatpush1.bf16.msra.mxu0 %v1777
    %2225 = vmatprep.subr.bf16.mxu0 %v1782
    %2226 = vmatpush1.bf16.msra.mxu0 %v1781
    %2227 = vmatprep.subr.bf16.mxu0 %v1786
    %2228 = vmatpush1.bf16.msra.mxu0 %v1785
    %2229 = vmatprep.subr.bf16.mxu0 %v1790
    %2230 = vmatpush1.bf16.msra.mxu0 %v1789
    %2231 = vmatprep.mubr.bf16.mxu0 %v552
    %2232 = vmatmul.mubr.bf16.gmra.mrb[0].mxu0 %v551
    %v2233 = vpop.f32.mrb[0].mxu0
    %v2234 = vadd.f32 %v2191, %v2233
    %v2235 = vpop.f32.mrb[0].mxu0
    %v2236 = vadd.f32 %v2193, %v2235
    %v2237 = vpop.f32.mrb[0].mxu0
    %v2238 = vadd.f32 %v2195, %v2237
    %v2239 = vpop.f32.mrb[0].mxu0
    %v2240 = vadd.f32 %v2197, %v2239
    %2241 = vdwg.mxu0
    %2242 = vmatprep.subr.bf16.mxu0 %v1794
    %2243 = vmatpush1.bf16.msra.mxu0 %v1793
    %2244 = vmatprep.subr.bf16.mxu0 %v1798
    %2245 = vmatpush1.bf16.msra.mxu0 %v1797
    %2246 = vmatprep.subr.bf16.mxu0 %v1802
    %2247 = vmatpush1.bf16.msra.mxu0 %v1801
    %2248 = vmatprep.subr.bf16.mxu0 %v1806
    %2249 = vmatpush1.bf16.msra.mxu0 %v1805
    %2250 = vmatprep.subr.bf16.mxu0 %v1810
    %2251 = vmatpush1.bf16.msra.mxu0 %v1809
    %2252 = vmatprep.subr.bf16.mxu0 %v1814
    %2253 = vmatpush1.bf16.msra.mxu0 %v1813
    %2254 = vmatprep.subr.bf16.mxu0 %v1818
    %2255 = vmatpush1.bf16.msra.mxu0 %v1817
    %2256 = vmatprep.subr.bf16.mxu0 %v1822
    %2257 = vmatpush1.bf16.msra.mxu0 %v1821
    %2258 = vmatprep.subr.bf16.mxu0 %v1826
    %2259 = vmatpush1.bf16.msra.mxu0 %v1825
    %2260 = vmatprep.subr.bf16.mxu0 %v1830
    %2261 = vmatpush1.bf16.msra.mxu0 %v1829
    %2262 = vmatprep.subr.bf16.mxu0 %v1834
    %2263 = vmatpush1.bf16.msra.mxu0 %v1833
    %2264 = vmatprep.subr.bf16.mxu0 %v1838
    %2265 = vmatpush1.bf16.msra.mxu0 %v1837
    %2266 = vmatprep.subr.bf16.mxu0 %v1842
    %2267 = vmatpush1.bf16.msra.mxu0 %v1841
    %2268 = vmatprep.subr.bf16.mxu0 %v1846
    %2269 = vmatpush1.bf16.msra.mxu0 %v1845
    %2270 = vmatprep.subr.bf16.mxu0 %v1850
    %2271 = vmatpush1.bf16.msra.mxu0 %v1849
    %2272 = vmatprep.subr.bf16.mxu0 %v1854
    %2273 = vmatpush1.bf16.msra.mxu0 %v1853
    %2274 = vmatprep.mubr.bf16.mxu0 %v554
    %2275 = vmatmul.mubr.bf16.gmra.mrb[0].mxu0 %v553
    %v2276 = vpop.f32.mrb[0].mxu0
    %v2277 = vadd.f32 %v2234, %v2276
    %v2278 = vpop.f32.mrb[0].mxu0
    %v2279 = vadd.f32 %v2236, %v2278
    %v2280 = vpop.f32.mrb[0].mxu0
    %v2281 = vadd.f32 %v2238, %v2280
    %v2282 = vpop.f32.mrb[0].mxu0
    %v2283 = vadd.f32 %v2240, %v2282
    %2284 = vdwg.mxu0
    %2285 = vmatprep.subr.bf16.mxu0 %v1604
    %2286 = vmatpush1.bf16.msra.mxu0 %v1603
    %2287 = vmatprep.subr.bf16.mxu0 %v1608
    %2288 = vmatpush1.bf16.msra.mxu0 %v1607
    %2289 = vmatprep.subr.bf16.mxu0 %v1612
    %2290 = vmatpush1.bf16.msra.mxu0 %v1611
    %2291 = vmatprep.subr.bf16.mxu0 %v1616
    %2292 = vmatpush1.bf16.msra.mxu0 %v1615
    %2293 = vmatprep.subr.bf16.mxu0 %v1620
    %2294 = vmatpush1.bf16.msra.mxu0 %v1619
    %2295 = vmatprep.subr.bf16.mxu0 %v1624
    %2296 = vmatpush1.bf16.msra.mxu0 %v1623
    %2297 = vmatprep.subr.bf16.mxu0 %v1628
    %2298 = vmatpush1.bf16.msra.mxu0 %v1627
    %2299 = vmatprep.subr.bf16.mxu0 %v1632
    %2300 = vmatpush1.bf16.msra.mxu0 %v1631
    %2301 = vmatprep.subr.bf16.mxu0 %v1636
    %2302 = vmatpush1.bf16.msra.mxu0 %v1635
    %2303 = vmatprep.subr.bf16.mxu0 %v1640
    %2304 = vmatpush1.bf16.msra.mxu0 %v1639
    %2305 = vmatprep.subr.bf16.mxu0 %v1644
    %2306 = vmatpush1.bf16.msra.mxu0 %v1643
    %2307 = vmatprep.subr.bf16.mxu0 %v1648
    %2308 = vmatpush1.bf16.msra.mxu0 %v1647
    %2309 = vmatprep.subr.bf16.mxu0 %v1652
    %2310 = vmatpush1.bf16.msra.mxu0 %v1651
    %2311 = vmatprep.subr.bf16.mxu0 %v1656
    %2312 = vmatpush1.bf16.msra.mxu0 %v1655
    %2313 = vmatprep.subr.bf16.mxu0 %v1660
    %2314 = vmatpush1.bf16.msra.mxu0 %v1659
    %2315 = vmatprep.subr.bf16.mxu0 %v1664
    %2316 = vmatpush1.bf16.msra.mxu0 %v1663
    %2317 = vmatprep.mubr.bf16.mxu0 %v548
    %2318 = vmatmul.mubr.bf16.gmra.mrb[0].mxu0 %v547
    %v2319 = vpop.f32.mrb[0].mxu0
    %v2320 = vadd.f32 %v824, %v2319
    %v2321 = vpop.f32.mrb[0].mxu0
    %v2322 = vadd.f32 %v828, %v2321
    %v2323 = vpop.f32.mrb[0].mxu0
    %v2324 = vadd.f32 %v824, %v2323
    %v2325 = vpop.f32.mrb[0].mxu0
    %v2326 = vadd.f32 %v828, %v2325
    %2327 = vdwg.mxu0
    %2328 = vmatprep.subr.bf16.mxu0 %v1668
    %2329 = vmatpush1.bf16.msra.mxu0 %v1667
    %2330 = vmatprep.subr.bf16.mxu0 %v1672
    %2331 = vmatpush1.bf16.msra.mxu0 %v1671
    %2332 = vmatprep.subr.bf16.mxu0 %v1676
    %2333 = vmatpush1.bf16.msra.mxu0 %v1675
    %2334 = vmatprep.subr.bf16.mxu0 %v1680
    %2335 = vmatpush1.bf16.msra.mxu0 %v1679
    %2336 = vmatprep.subr.bf16.mxu0 %v1684
    %2337 = vmatpush1.bf16.msra.mxu0 %v1683
    %2338 = vmatprep.subr.bf16.mxu0 %v1688
    %2339 = vmatpush1.bf16.msra.mxu0 %v1687
    %2340 = vmatprep.subr.bf16.mxu0 %v1692
    %2341 = vmatpush1.bf16.msra.mxu0 %v1691
    %2342 = vmatprep.subr.bf16.mxu0 %v1696
    %2343 = vmatpush1.bf16.msra.mxu0 %v1695
    %2344 = vmatprep.subr.bf16.mxu0 %v1700
    %2345 = vmatpush1.bf16.msra.mxu0 %v1699
    %2346 = vmatprep.subr.bf16.mxu0 %v1704
    %2347 = vmatpush1.bf16.msra.mxu0 %v1703
    %2348 = vmatprep.subr.bf16.mxu0 %v1708
    %2349 = vmatpush1.bf16.msra.mxu0 %v1707
    %2350 = vmatprep.subr.bf16.mxu0 %v1712
    %2351 = vmatpush1.bf16.msra.mxu0 %v1711
    %2352 = vmatprep.subr.bf16.mxu0 %v1716
    %2353 = vmatpush1.bf16.msra.mxu0 %v1715
    %2354 = vmatprep.subr.bf16.mxu0 %v1720
    %2355 = vmatpush1.bf16.msra.mxu0 %v1719
    %2356 = vmatprep.subr.bf16.mxu0 %v1724
    %2357 = vmatpush1.bf16.msra.mxu0 %v1723
    %2358 = vmatprep.subr.bf16.mxu0 %v1728
    %2359 = vmatpush1.bf16.msra.mxu0 %v1727
    %2360 = vmatprep.mubr.bf16.mxu0 %v550
    %2361 = vmatmul.mubr.bf16.gmra.mrb[0].mxu0 %v549
    %v2362 = vpop.f32.mrb[0].mxu0
    %v2363 = vadd.f32 %v2320, %v2362
    %v2364 = vpop.f32.mrb[0].mxu0
    %v2365 = vadd.f32 %v2322, %v2364
    %v2366 = vpop.f32.mrb[0].mxu0
    %v2367 = vadd.f32 %v2324, %v2366
    %v2368 = vpop.f32.mrb[0].mxu0
    %v2369 = vadd.f32 %v2326, %v2368
    %2370 = vdwg.mxu0
    %2371 = vmatprep.subr.bf16.mxu0 %v1732
    %2372 = vmatpush1.bf16.msra.mxu0 %v1731
    %2373 = vmatprep.subr.bf16.mxu0 %v1736
    %2374 = vmatpush1.bf16.msra.mxu0 %v1735
    %2375 = vmatprep.subr.bf16.mxu0 %v1740
    %2376 = vmatpush1.bf16.msra.mxu0 %v1739
    %2377 = vmatprep.subr.bf16.mxu0 %v1744
    %2378 = vmatpush1.bf16.msra.mxu0 %v1743
    %2379 = vmatprep.subr.bf16.mxu0 %v1748
    %2380 = vmatpush1.bf16.msra.mxu0 %v1747
    %2381 = vmatprep.subr.bf16.mxu0 %v1752
    %2382 = vmatpush1.bf16.msra.mxu0 %v1751
    %2383 = vmatprep.subr.bf16.mxu0 %v1756
    %2384 = vmatpush1.bf16.msra.mxu0 %v1755
    %2385 = vmatprep.subr.bf16.mxu0 %v1760
    %2386 = vmatpush1.bf16.msra.mxu0 %v1759
    %2387 = vmatprep.subr.bf16.mxu0 %v1764
    %2388 = vmatpush1.bf16.msra.mxu0 %v1763
    %2389 = vmatprep.subr.bf16.mxu0 %v1768
    %2390 = vmatpush1.bf16.msra.mxu0 %v1767
    %2391 = vmatprep.subr.bf16.mxu0 %v1772
    %2392 = vmatpush1.bf16.msra.mxu0 %v1771
    %2393 = vmatprep.subr.bf16.mxu0 %v1776
    %2394 = vmatpush1.bf16.msra.mxu0 %v1775
    %2395 = vmatprep.subr.bf16.mxu0 %v1780
    %2396 = vmatpush1.bf16.msra.mxu0 %v1779
    %2397 = vmatprep.subr.bf16.mxu0 %v1784
    %2398 = vmatpush1.bf16.msra.mxu0 %v1783
    %2399 = vmatprep.subr.bf16.mxu0 %v1788
    %2400 = vmatpush1.bf16.msra.mxu0 %v1787
    %2401 = vmatprep.subr.bf16.mxu0 %v1792
    %2402 = vmatpush1.bf16.msra.mxu0 %v1791
    %2403 = vmatprep.mubr.bf16.mxu0 %v552
    %2404 = vmatmul.mubr.bf16.gmra.mrb[0].mxu0 %v551
    %v2405 = vpop.f32.mrb[0].mxu0
    %v2406 = vadd.f32 %v2363, %v2405
    %v2407 = vpop.f32.mrb[0].mxu0
    %v2408 = vadd.f32 %v2365, %v2407
    %v2409 = vpop.f32.mrb[0].mxu0
    %v2410 = vadd.f32 %v2367, %v2409
    %v2411 = vpop.f32.mrb[0].mxu0
    %v2412 = vadd.f32 %v2369, %v2411
    %2413 = vdwg.mxu0
    %2414 = vmatprep.subr.bf16.mxu0 %v1796
    %2415 = vmatpush1.bf16.msra.mxu0 %v1795
    %2416 = vmatprep.subr.bf16.mxu0 %v1800
    %2417 = vmatpush1.bf16.msra.mxu0 %v1799
    %2418 = vmatprep.subr.bf16.mxu0 %v1804
    %2419 = vmatpush1.bf16.msra.mxu0 %v1803
    %2420 = vmatprep.subr.bf16.mxu0 %v1808
    %2421 = vmatpush1.bf16.msra.mxu0 %v1807
    %2422 = vmatprep.subr.bf16.mxu0 %v1812
    %2423 = vmatpush1.bf16.msra.mxu0 %v1811
    %2424 = vmatprep.subr.bf16.mxu0 %v1816
    %2425 = vmatpush1.bf16.msra.mxu0 %v1815
    %2426 = vmatprep.subr.bf16.mxu0 %v1820
    %2427 = vmatpush1.bf16.msra.mxu0 %v1819
    %2428 = vmatprep.subr.bf16.mxu0 %v1824
    %2429 = vmatpush1.bf16.msra.mxu0 %v1823
    %2430 = vmatprep.subr.bf16.mxu0 %v1828
    %2431 = vmatpush1.bf16.msra.mxu0 %v1827
    %2432 = vmatprep.subr.bf16.mxu0 %v1832
    %2433 = vmatpush1.bf16.msra.mxu0 %v1831
    %2434 = vmatprep.subr.bf16.mxu0 %v1836
    %2435 = vmatpush1.bf16.msra.mxu0 %v1835
    %2436 = vmatprep.subr.bf16.mxu0 %v1840
    %2437 = vmatpush1.bf16.msra.mxu0 %v1839
    %2438 = vmatprep.subr.bf16.mxu0 %v1844
    %2439 = vmatpush1.bf16.msra.mxu0 %v1843
    %2440 = vmatprep.subr.bf16.mxu0 %v1848
    %2441 = vmatpush1.bf16.msra.mxu0 %v1847
    %2442 = vmatprep.subr.bf16.mxu0 %v1852
    %2443 = vmatpush1.bf16.msra.mxu0 %v1851
    %2444 = vmatprep.subr.bf16.mxu0 %v1856
    %2445 = vmatpush1.bf16.msra.mxu0 %v1855
    %2446 = vmatprep.mubr.bf16.mxu0 %v554
    %2447 = vmatmul.mubr.bf16.gmra.mrb[0].mxu0 %v553
    %v2448 = vpop.f32.mrb[0].mxu0
    %v2449 = vadd.f32 %v2406, %v2448
    %v2450 = vpop.f32.mrb[0].mxu0
    %v2451 = vadd.f32 %v2408, %v2450
    %v2452 = vpop.f32.mrb[0].mxu0
    %v2453 = vadd.f32 %v2410, %v2452
    %v2454 = vpop.f32.mrb[0].mxu0
    %v2455 = vadd.f32 %v2412, %v2454
    %2456 = vdwg.mxu0
    %v2457 = vmax.f32 %v2277, 0.0
    %v2458 = vmax.f32 %v2279, 0.0
    %v2459 = vmax.f32 %v2449, 0.0
    %v2460 = vmax.f32 %v2451, 0.0
    %v2461 = vmax.f32 %v2281, 0.0
    %v2462 = vmax.f32 %v2283, 0.0
    %v2463 = vmax.f32 %v2453, 0.0
    %v2464 = vmax.f32 %v2455, 0.0
    %v2465 = vpack.c.bf16 %v2461, %v2457
    %v2466 = vpack.c.bf16 %v2462, %v2458
    %v2467 = vpack.c.bf16 %v2463, %v2459
    %v2468 = vpack.c.bf16 %v2464, %v2460
    %v2469 = vld [vmem:[#allocation11] sm:$0xff]
    %v2470 = vld [vmem:[#allocation11 + $0x8] sm:$0xff]
    %v2471 = vld [vmem:[#allocation11 + $0x10] sm:$0xff]
    %v2472 = vld [vmem:[#allocation11 + $0x18] sm:$0xff]
    %v2473 = vld [vmem:[#allocation11 + $0x20] sm:$0xff]
    %v2474 = vld [vmem:[#allocation11 + $0x28] sm:$0xff]
    %v2475 = vld [vmem:[#allocation11 + $0x30] sm:$0xff]
    %v2476 = vld [vmem:[#allocation11 + $0x38] sm:$0xff]
    %v2477 = vld [vmem:[#allocation11 + $0x40] sm:$0xff]
    %v2478 = vld [vmem:[#allocation11 + $0x48] sm:$0xff]
    %v2479 = vld [vmem:[#allocation11 + $0x50] sm:$0xff]
    %v2480 = vld [vmem:[#allocation11 + $0x58] sm:$0xff]
    %v2481 = vld [vmem:[#allocation11 + $0x60] sm:$0xff]
    %v2482 = vld [vmem:[#allocation11 + $0x68] sm:$0xff]
    %v2483 = vld [vmem:[#allocation11 + $0x70] sm:$0xff]
    %v2484 = vld [vmem:[#allocation11 + $0x78] sm:$0xff]
    %v2485 = vld [vmem:[#allocation11 + $0x80] sm:$0xff]
    %v2486 = vld [vmem:[#allocation11 + $0x88] sm:$0xff]
    %v2487 = vld [vmem:[#allocation11 + $0x90] sm:$0xff]
    %v2488 = vld [vmem:[#allocation11 + $0x98] sm:$0xff]
    %v2489 = vld [vmem:[#allocation11 + $0xa0] sm:$0xff]
    %v2490 = vld [vmem:[#allocation11 + $0xa8] sm:$0xff]
    %v2491 = vld [vmem:[#allocation11 + $0xb0] sm:$0xff]
    %v2492 = vld [vmem:[#allocation11 + $0xb8] sm:$0xff]
    %v2493 = vld [vmem:[#allocation11 + $0xc0] sm:$0xff]
    %v2494 = vld [vmem:[#allocation11 + $0xc8] sm:$0xff]
    %v2495 = vld [vmem:[#allocation11 + $0xd0] sm:$0xff]
    %v2496 = vld [vmem:[#allocation11 + $0xd8] sm:$0xff]
    %v2497 = vld [vmem:[#allocation11 + $0xe0] sm:$0xff]
    %v2498 = vld [vmem:[#allocation11 + $0xe8] sm:$0xff]
    %v2499 = vld [vmem:[#allocation11 + $0xf0] sm:$0xff]
    %v2500 = vld [vmem:[#allocation11 + $0xf8] sm:$0xff]
    %v2501 = vld [vmem:[#allocation11 + $0x100] sm:$0xff]
    %v2502 = vld [vmem:[#allocation11 + $0x108] sm:$0xff]
    %v2503 = vld [vmem:[#allocation11 + $0x110] sm:$0xff]
    %v2504 = vld [vmem:[#allocation11 + $0x118] sm:$0xff]
    %v2505 = vld [vmem:[#allocation11 + $0x120] sm:$0xff]
    %v2506 = vld [vmem:[#allocation11 + $0x128] sm:$0xff]
    %v2507 = vld [vmem:[#allocation11 + $0x130] sm:$0xff]
    %v2508 = vld [vmem:[#allocation11 + $0x138] sm:$0xff]
    %v2509 = vld [vmem:[#allocation11 + $0x140] sm:$0xff]
    %v2510 = vld [vmem:[#allocation11 + $0x148] sm:$0xff]
    %v2511 = vld [vmem:[#allocation11 + $0x150] sm:$0xff]
    %v2512 = vld [vmem:[#allocation11 + $0x158] sm:$0xff]
    %v2513 = vld [vmem:[#allocation11 + $0x160] sm:$0xff]
    %v2514 = vld [vmem:[#allocation11 + $0x168] sm:$0xff]
    %v2515 = vld [vmem:[#allocation11 + $0x170] sm:$0xff]
    %v2516 = vld [vmem:[#allocation11 + $0x178] sm:$0xff]
    %v2517 = vld [vmem:[#allocation11 + $0x180] sm:$0xff]
    %v2518 = vld [vmem:[#allocation11 + $0x188] sm:$0xff]
    %v2519 = vld [vmem:[#allocation11 + $0x190] sm:$0xff]
    %v2520 = vld [vmem:[#allocation11 + $0x198] sm:$0xff]
    %v2521 = vld [vmem:[#allocation11 + $0x1a0] sm:$0xff]
    %v2522 = vld [vmem:[#allocation11 + $0x1a8] sm:$0xff]
    %v2523 = vld [vmem:[#allocation11 + $0x1b0] sm:$0xff]
    %v2524 = vld [vmem:[#allocation11 + $0x1b8] sm:$0xff]
    %v2525 = vld [vmem:[#allocation11 + $0x1c0] sm:$0xff]
    %v2526 = vld [vmem:[#allocation11 + $0x1c8] sm:$0xff]
    %v2527 = vld [vmem:[#allocation11 + $0x1d0] sm:$0xff]
    %v2528 = vld [vmem:[#allocation11 + $0x1d8] sm:$0xff]
    %v2529 = vld [vmem:[#allocation11 + $0x1e0] sm:$0xff]
    %v2530 = vld [vmem:[#allocation11 + $0x1e8] sm:$0xff]
    %v2531 = vld [vmem:[#allocation11 + $0x1f0] sm:$0xff]
    %v2532 = vld [vmem:[#allocation11 + $0x1f8] sm:$0xff]
    %v2533 = vld [vmem:[%s8] sm:$0x3]
    %v2535 = vlaneseq
    %v2536 = vshrl.u32 %v2535, 7
    %v2537 = vsub.s32 0, %v2536
    %v2538 = vrot.slane %v2533, %v2537
    %v2539 = vlaneseq
    %v2540 = vshrl.u32 %v2539, 7
    %v2541 = vsub.s32 1, %v2540
    %v2542 = vrot.slane %v2533, %v2541
    %v2609 = vunpack.c.l.b16 %v2469
    %v2610 = vunpack.c.h.b16 %v2469
    %v2611 = vunpack.c.l.b16 %v2470
    %v2612 = vunpack.c.h.b16 %v2470
    %v2613 = vunpack.c.l.b16 %v2471
    %v2614 = vunpack.c.h.b16 %v2471
    %v2615 = vunpack.c.l.b16 %v2472
    %v2616 = vunpack.c.h.b16 %v2472
    %v2617 = vunpack.c.l.b16 %v2473
    %v2618 = vunpack.c.h.b16 %v2473
    %v2619 = vunpack.c.l.b16 %v2474
    %v2620 = vunpack.c.h.b16 %v2474
    %v2621 = vunpack.c.l.b16 %v2475
    %v2622 = vunpack.c.h.b16 %v2475
    %v2623 = vunpack.c.l.b16 %v2476
    %v2624 = vunpack.c.h.b16 %v2476
    %v2625 = vunpack.c.l.b16 %v2477
    %v2626 = vunpack.c.h.b16 %v2477
    %v2627 = vunpack.c.l.b16 %v2478
    %v2628 = vunpack.c.h.b16 %v2478
    %v2629 = vunpack.c.l.b16 %v2479
    %v2630 = vunpack.c.h.b16 %v2479
    %v2631 = vunpack.c.l.b16 %v2480
    %v2632 = vunpack.c.h.b16 %v2480
    %v2633 = vunpack.c.l.b16 %v2481
    %v2634 = vunpack.c.h.b16 %v2481
    %v2635 = vunpack.c.l.b16 %v2482
    %v2636 = vunpack.c.h.b16 %v2482
    %v2637 = vunpack.c.l.b16 %v2483
    %v2638 = vunpack.c.h.b16 %v2483
    %v2639 = vunpack.c.l.b16 %v2484
    %v2640 = vunpack.c.h.b16 %v2484
    %v2641 = vunpack.c.l.b16 %v2485
    %v2642 = vunpack.c.h.b16 %v2485
    %v2643 = vunpack.c.l.b16 %v2486
    %v2644 = vunpack.c.h.b16 %v2486
    %v2645 = vunpack.c.l.b16 %v2487
    %v2646 = vunpack.c.h.b16 %v2487
    %v2647 = vunpack.c.l.b16 %v2488
    %v2648 = vunpack.c.h.b16 %v2488
    %v2649 = vunpack.c.l.b16 %v2489
    %v2650 = vunpack.c.h.b16 %v2489
    %v2651 = vunpack.c.l.b16 %v2490
    %v2652 = vunpack.c.h.b16 %v2490
    %v2653 = vunpack.c.l.b16 %v2491
    %v2654 = vunpack.c.h.b16 %v2491
    %v2655 = vunpack.c.l.b16 %v2492
    %v2656 = vunpack.c.h.b16 %v2492
    %v2657 = vunpack.c.l.b16 %v2493
    %v2658 = vunpack.c.h.b16 %v2493
    %v2659 = vunpack.c.l.b16 %v2494
    %v2660 = vunpack.c.h.b16 %v2494
    %v2661 = vunpack.c.l.b16 %v2495
    %v2662 = vunpack.c.h.b16 %v2495
    %v2663 = vunpack.c.l.b16 %v2496
    %v2664 = vunpack.c.h.b16 %v2496
    %v2665 = vunpack.c.l.b16 %v2497
    %v2666 = vunpack.c.h.b16 %v2497
    %v2667 = vunpack.c.l.b16 %v2498
    %v2668 = vunpack.c.h.b16 %v2498
    %v2669 = vunpack.c.l.b16 %v2499
    %v2670 = vunpack.c.h.b16 %v2499
    %v2671 = vunpack.c.l.b16 %v2500
    %v2672 = vunpack.c.h.b16 %v2500
    %v2673 = vunpack.c.l.b16 %v2501
    %v2674 = vunpack.c.h.b16 %v2501
    %v2675 = vunpack.c.l.b16 %v2502
    %v2676 = vunpack.c.h.b16 %v2502
    %v2677 = vunpack.c.l.b16 %v2503
    %v2678 = vunpack.c.h.b16 %v2503
    %v2679 = vunpack.c.l.b16 %v2504
    %v2680 = vunpack.c.h.b16 %v2504
    %v2681 = vunpack.c.l.b16 %v2505
    %v2682 = vunpack.c.h.b16 %v2505
    %v2683 = vunpack.c.l.b16 %v2506
    %v2684 = vunpack.c.h.b16 %v2506
    %v2685 = vunpack.c.l.b16 %v2507
    %v2686 = vunpack.c.h.b16 %v2507
    %v2687 = vunpack.c.l.b16 %v2508
    %v2688 = vunpack.c.h.b16 %v2508
    %v2689 = vunpack.c.l.b16 %v2509
    %v2690 = vunpack.c.h.b16 %v2509
    %v2691 = vunpack.c.l.b16 %v2510
    %v2692 = vunpack.c.h.b16 %v2510
    %v2693 = vunpack.c.l.b16 %v2511
    %v2694 = vunpack.c.h.b16 %v2511
    %v2695 = vunpack.c.l.b16 %v2512
    %v2696 = vunpack.c.h.b16 %v2512
    %v2697 = vunpack.c.l.b16 %v2513
    %v2698 = vunpack.c.h.b16 %v2513
    %v2699 = vunpack.c.l.b16 %v2514
    %v2700 = vunpack.c.h.b16 %v2514
    %v2701 = vunpack.c.l.b16 %v2515
    %v2702 = vunpack.c.h.b16 %v2515
    %v2703 = vunpack.c.l.b16 %v2516
    %v2704 = vunpack.c.h.b16 %v2516
    %v2705 = vunpack.c.l.b16 %v2517
    %v2706 = vunpack.c.h.b16 %v2517
    %v2707 = vunpack.c.l.b16 %v2518
    %v2708 = vunpack.c.h.b16 %v2518
    %v2709 = vunpack.c.l.b16 %v2519
    %v2710 = vunpack.c.h.b16 %v2519
    %v2711 = vunpack.c.l.b16 %v2520
    %v2712 = vunpack.c.h.b16 %v2520
    %v2713 = vunpack.c.l.b16 %v2521
    %v2714 = vunpack.c.h.b16 %v2521
    %v2715 = vunpack.c.l.b16 %v2522
    %v2716 = vunpack.c.h.b16 %v2522
    %v2717 = vunpack.c.l.b16 %v2523
    %v2718 = vunpack.c.h.b16 %v2523
    %v2719 = vunpack.c.l.b16 %v2524
    %v2720 = vunpack.c.h.b16 %v2524
    %v2721 = vunpack.c.l.b16 %v2525
    %v2722 = vunpack.c.h.b16 %v2525
    %v2723 = vunpack.c.l.b16 %v2526
    %v2724 = vunpack.c.h.b16 %v2526
    %v2725 = vunpack.c.l.b16 %v2527
    %v2726 = vunpack.c.h.b16 %v2527
    %v2727 = vunpack.c.l.b16 %v2528
    %v2728 = vunpack.c.h.b16 %v2528
    %v2729 = vunpack.c.l.b16 %v2529
    %v2730 = vunpack.c.h.b16 %v2529
    %v2731 = vunpack.c.l.b16 %v2530
    %v2732 = vunpack.c.h.b16 %v2530
    %v2733 = vunpack.c.l.b16 %v2531
    %v2734 = vunpack.c.h.b16 %v2531
    %v2735 = vunpack.c.l.b16 %v2532
    %v2736 = vunpack.c.h.b16 %v2532
    %v2737 = vpack.c.b16 %v2611, %v2609
    %v2738 = vpack.c.b16 %v2612, %v2610
    %v2739 = vpack.c.b16 %v2615, %v2613
    %v2740 = vpack.c.b16 %v2616, %v2614
    %v2741 = vpack.c.b16 %v2619, %v2617
    %v2742 = vpack.c.b16 %v2620, %v2618
    %v2743 = vpack.c.b16 %v2623, %v2621
    %v2744 = vpack.c.b16 %v2624, %v2622
    %v2745 = vpack.c.b16 %v2627, %v2625
    %v2746 = vpack.c.b16 %v2628, %v2626
    %v2747 = vpack.c.b16 %v2631, %v2629
    %v2748 = vpack.c.b16 %v2632, %v2630
    %v2749 = vpack.c.b16 %v2635, %v2633
    %v2750 = vpack.c.b16 %v2636, %v2634
    %v2751 = vpack.c.b16 %v2639, %v2637
    %v2752 = vpack.c.b16 %v2640, %v2638
    %v2753 = vpack.c.b16 %v2643, %v2641
    %v2754 = vpack.c.b16 %v2644, %v2642
    %v2755 = vpack.c.b16 %v2647, %v2645
    %v2756 = vpack.c.b16 %v2648, %v2646
    %v2757 = vpack.c.b16 %v2651, %v2649
    %v2758 = vpack.c.b16 %v2652, %v2650
    %v2759 = vpack.c.b16 %v2655, %v2653
    %v2760 = vpack.c.b16 %v2656, %v2654
    %v2761 = vpack.c.b16 %v2659, %v2657
    %v2762 = vpack.c.b16 %v2660, %v2658
    %v2763 = vpack.c.b16 %v2663, %v2661
    %v2764 = vpack.c.b16 %v2664, %v2662
    %v2765 = vpack.c.b16 %v2667, %v2665
    %v2766 = vpack.c.b16 %v2668, %v2666
    %v2767 = vpack.c.b16 %v2671, %v2669
    %v2768 = vpack.c.b16 %v2672, %v2670
    %v2769 = vpack.c.b16 %v2675, %v2673
    %v2770 = vpack.c.b16 %v2676, %v2674
    %v2771 = vpack.c.b16 %v2679, %v2677
    %v2772 = vpack.c.b16 %v2680, %v2678
    %v2773 = vpack.c.b16 %v2683, %v2681
    %v2774 = vpack.c.b16 %v2684, %v2682
    %v2775 = vpack.c.b16 %v2687, %v2685
    %v2776 = vpack.c.b16 %v2688, %v2686
    %v2777 = vpack.c.b16 %v2691, %v2689
    %v2778 = vpack.c.b16 %v2692, %v2690
    %v2779 = vpack.c.b16 %v2695, %v2693
    %v2780 = vpack.c.b16 %v2696, %v2694
    %v2781 = vpack.c.b16 %v2699, %v2697
    %v2782 = vpack.c.b16 %v2700, %v2698
    %v2783 = vpack.c.b16 %v2703, %v2701
    %v2784 = vpack.c.b16 %v2704, %v2702
    %v2785 = vpack.c.b16 %v2707, %v2705
    %v2786 = vpack.c.b16 %v2708, %v2706
    %v2787 = vpack.c.b16 %v2711, %v2709
    %v2788 = vpack.c.b16 %v2712, %v2710
    %v2789 = vpack.c.b16 %v2715, %v2713
    %v2790 = vpack.c.b16 %v2716, %v2714
    %v2791 = vpack.c.b16 %v2719, %v2717
    %v2792 = vpack.c.b16 %v2720, %v2718
    %v2793 = vpack.c.b16 %v2723, %v2721
    %v2794 = vpack.c.b16 %v2724, %v2722
    %v2795 = vpack.c.b16 %v2727, %v2725
    %v2796 = vpack.c.b16 %v2728, %v2726
    %v2797 = vpack.c.b16 %v2731, %v2729
    %v2798 = vpack.c.b16 %v2732, %v2730
    %v2799 = vpack.c.b16 %v2735, %v2733
    %v2800 = vpack.c.b16 %v2736, %v2734
    %2865 = vmatprep.subr.bf16.mxu0 %v2738
    %2866 = vmatpush1.bf16.msra.mxu0 %v2737
    %2867 = vmatprep.subr.bf16.mxu0 %v2740
    %2868 = vmatpush1.bf16.msra.mxu0 %v2739
    %2869 = vmatprep.subr.bf16.mxu0 %v2742
    %2870 = vmatpush1.bf16.msra.mxu0 %v2741
    %2871 = vmatprep.subr.bf16.mxu0 %v2744
    %2872 = vmatpush1.bf16.msra.mxu0 %v2743
    %2873 = vmatprep.subr.bf16.mxu0 %v2746
    %2874 = vmatpush1.bf16.msra.mxu0 %v2745
    %2875 = vmatprep.subr.bf16.mxu0 %v2748
    %2876 = vmatpush1.bf16.msra.mxu0 %v2747
    %2877 = vmatprep.subr.bf16.mxu0 %v2750
    %2878 = vmatpush1.bf16.msra.mxu0 %v2749
    %2879 = vmatprep.subr.bf16.mxu0 %v2752
    %2880 = vmatpush1.bf16.msra.mxu0 %v2751
    %2881 = vmatprep.subr.bf16.mxu0 %v2754
    %2882 = vmatpush1.bf16.msra.mxu0 %v2753
    %2883 = vmatprep.subr.bf16.mxu0 %v2756
    %2884 = vmatpush1.bf16.msra.mxu0 %v2755
    %2885 = vmatprep.subr.bf16.mxu0 %v2758
    %2886 = vmatpush1.bf16.msra.mxu0 %v2757
    %2887 = vmatprep.subr.bf16.mxu0 %v2760
    %2888 = vmatpush1.bf16.msra.mxu0 %v2759
    %2889 = vmatprep.subr.bf16.mxu0 %v2762
    %2890 = vmatpush1.bf16.msra.mxu0 %v2761
    %2891 = vmatprep.subr.bf16.mxu0 %v2764
    %2892 = vmatpush1.bf16.msra.mxu0 %v2763
    %2893 = vmatprep.subr.bf16.mxu0 %v2766
    %2894 = vmatpush1.bf16.msra.mxu0 %v2765
    %2895 = vmatprep.subr.bf16.mxu0 %v2768
    %2896 = vmatpush1.bf16.msra.mxu0 %v2767
    %2897 = vmatprep.mubr.bf16.mxu0 %v2466
    %2898 = vmatmul.mubr.bf16.gmra.mrb[0].mxu0 %v2465
    %v2899 = vpop.f32.mrb[0].mxu0
    %v2900 = vadd.f32 %v2538, %v2899
    %v2901 = vpop.f32.mrb[0].mxu0
    %v2902 = vadd.f32 %v2542, %v2901
    %v2903 = vpop.f32.mrb[0].mxu0
    %v2904 = vadd.f32 %v2538, %v2903
    %v2905 = vpop.f32.mrb[0].mxu0
    %v2906 = vadd.f32 %v2542, %v2905
    %2907 = vdwg.mxu0
    %2908 = vmatprep.subr.bf16.mxu0 %v2770
    %2909 = vmatpush1.bf16.msra.mxu0 %v2769
    %2910 = vmatprep.subr.bf16.mxu0 %v2772
    %2911 = vmatpush1.bf16.msra.mxu0 %v2771
    %2912 = vmatprep.subr.bf16.mxu0 %v2774
    %2913 = vmatpush1.bf16.msra.mxu0 %v2773
    %2914 = vmatprep.subr.bf16.mxu0 %v2776
    %2915 = vmatpush1.bf16.msra.mxu0 %v2775
    %2916 = vmatprep.subr.bf16.mxu0 %v2778
    %2917 = vmatpush1.bf16.msra.mxu0 %v2777
    %2918 = vmatprep.subr.bf16.mxu0 %v2780
    %2919 = vmatpush1.bf16.msra.mxu0 %v2779
    %2920 = vmatprep.subr.bf16.mxu0 %v2782
    %2921 = vmatpush1.bf16.msra.mxu0 %v2781
    %2922 = vmatprep.subr.bf16.mxu0 %v2784
    %2923 = vmatpush1.bf16.msra.mxu0 %v2783
    %2924 = vmatprep.subr.bf16.mxu0 %v2786
    %2925 = vmatpush1.bf16.msra.mxu0 %v2785
    %2926 = vmatprep.subr.bf16.mxu0 %v2788
    %2927 = vmatpush1.bf16.msra.mxu0 %v2787
    %2928 = vmatprep.subr.bf16.mxu0 %v2790
    %2929 = vmatpush1.bf16.msra.mxu0 %v2789
    %2930 = vmatprep.subr.bf16.mxu0 %v2792
    %2931 = vmatpush1.bf16.msra.mxu0 %v2791
    %2932 = vmatprep.subr.bf16.mxu0 %v2794
    %2933 = vmatpush1.bf16.msra.mxu0 %v2793
    %2934 = vmatprep.subr.bf16.mxu0 %v2796
    %2935 = vmatpush1.bf16.msra.mxu0 %v2795
    %2936 = vmatprep.subr.bf16.mxu0 %v2798
    %2937 = vmatpush1.bf16.msra.mxu0 %v2797
    %2938 = vmatprep.subr.bf16.mxu0 %v2800
    %2939 = vmatpush1.bf16.msra.mxu0 %v2799
    %2940 = vmatprep.mubr.bf16.mxu0 %v2468
    %2941 = vmatmul.mubr.bf16.gmra.mrb[0].mxu0 %v2467
    %v2942 = vpop.f32.mrb[0].mxu0
    %v2943 = vadd.f32 %v2900, %v2942
    %v2944 = vpop.f32.mrb[0].mxu0
    %v2945 = vadd.f32 %v2902, %v2944
    %v2946 = vpop.f32.mrb[0].mxu0
    %v2947 = vadd.f32 %v2904, %v2946
    %v2948 = vpop.f32.mrb[0].mxu0
    %v2949 = vadd.f32 %v2906, %v2948
    %2950 = vdwg.mxu0
    %v2951 = vmax.f32 %v2943, 0.0
    %v2952 = vmax.f32 %v2945, 0.0
    %v2953 = vmax.f32 %v2947, 0.0
    %v2954 = vmax.f32 %v2949, 0.0
    %v2955 = vpack.c.bf16 %v2953, %v2951
    %v2956 = vpack.c.bf16 %v2954, %v2952
    %v2957 = vld [vmem:[#allocation13] sm:$0xf]
    %v2958 = vld [vmem:[#allocation13 + $0x4] sm:$0xf]
    %v2959 = vld [vmem:[#allocation13 + $0x8] sm:$0xf]
    %v2960 = vld [vmem:[#allocation13 + $0xc] sm:$0xf]
    %v2961 = vld [vmem:[#allocation13 + $0x10] sm:$0xf]
    %v2962 = vld [vmem:[#allocation13 + $0x14] sm:$0xf]
    %v2963 = vld [vmem:[#allocation13 + $0x18] sm:$0xf]
    %v2964 = vld [vmem:[#allocation13 + $0x1c] sm:$0xf]
    %v2965 = vld [vmem:[#allocation13 + $0x20] sm:$0xf]
    %v2966 = vld [vmem:[#allocation13 + $0x24] sm:$0xf]
    %v2967 = vld [vmem:[#allocation13 + $0x28] sm:$0xf]
    %v2968 = vld [vmem:[#allocation13 + $0x2c] sm:$0xf]
    %v2969 = vld [vmem:[#allocation13 + $0x30] sm:$0xf]
    %v2970 = vld [vmem:[#allocation13 + $0x34] sm:$0xf]
    %v2971 = vld [vmem:[#allocation13 + $0x38] sm:$0xf]
    %v2972 = vld [vmem:[#allocation13 + $0x3c] sm:$0xf]
    %v2973 = vld [vmem:[#allocation13 + $0x40] sm:$0xf]
    %v2974 = vld [vmem:[#allocation13 + $0x44] sm:$0xf]
    %v2975 = vld [vmem:[#allocation13 + $0x48] sm:$0xf]
    %v2976 = vld [vmem:[#allocation13 + $0x4c] sm:$0xf]
    %v2977 = vld [vmem:[#allocation13 + $0x50] sm:$0xf]
    %v2978 = vld [vmem:[#allocation13 + $0x54] sm:$0xf]
    %v2979 = vld [vmem:[#allocation13 + $0x58] sm:$0xf]
    %v2980 = vld [vmem:[#allocation13 + $0x5c] sm:$0xf]
    %v2981 = vld [vmem:[#allocation13 + $0x60] sm:$0xf]
    %v2982 = vld [vmem:[#allocation13 + $0x64] sm:$0xf]
    %v2983 = vld [vmem:[#allocation13 + $0x68] sm:$0xf]
    %v2984 = vld [vmem:[#allocation13 + $0x6c] sm:$0xf]
    %v2985 = vld [vmem:[#allocation13 + $0x70] sm:$0xf]
    %v2986 = vld [vmem:[#allocation13 + $0x74] sm:$0xf]
    %v2987 = vld [vmem:[#allocation13 + $0x78] sm:$0xf]
    %v2988 = vld [vmem:[#allocation13 + $0x7c] sm:$0xf]
    %v2989 = vld [vmem:[%s10] sm:$0x1]
    %v2991 = vlaneseq
    %v2992 = vshrl.u32 %v2991, 7
    %v2993 = vsub.s32 0, %v2992
    %v2994 = vrot.slane %v2989, %v2993
    %v3028 = vunpack.c.l.b16 %v2957
    %v3029 = vunpack.c.l.b16 %v2958
    %v3030 = vunpack.c.l.b16 %v2959
    %v3031 = vunpack.c.l.b16 %v2960
    %v3032 = vunpack.c.l.b16 %v2961
    %v3033 = vunpack.c.l.b16 %v2962
    %v3034 = vunpack.c.l.b16 %v2963
    %v3035 = vunpack.c.l.b16 %v2964
    %v3036 = vunpack.c.l.b16 %v2965
    %v3037 = vunpack.c.l.b16 %v2966
    %v3038 = vunpack.c.l.b16 %v2967
    %v3039 = vunpack.c.l.b16 %v2968
    %v3040 = vunpack.c.l.b16 %v2969
    %v3041 = vunpack.c.l.b16 %v2970
    %v3042 = vunpack.c.l.b16 %v2971
    %v3043 = vunpack.c.l.b16 %v2972
    %v3044 = vunpack.c.l.b16 %v2973
    %v3045 = vunpack.c.l.b16 %v2974
    %v3046 = vunpack.c.l.b16 %v2975
    %v3047 = vunpack.c.l.b16 %v2976
    %v3048 = vunpack.c.l.b16 %v2977
    %v3049 = vunpack.c.l.b16 %v2978
    %v3050 = vunpack.c.l.b16 %v2979
    %v3051 = vunpack.c.l.b16 %v2980
    %v3052 = vunpack.c.l.b16 %v2981
    %v3053 = vunpack.c.l.b16 %v2982
    %v3054 = vunpack.c.l.b16 %v2983
    %v3055 = vunpack.c.l.b16 %v2984
    %v3056 = vunpack.c.l.b16 %v2985
    %v3057 = vunpack.c.l.b16 %v2986
    %v3058 = vunpack.c.l.b16 %v2987
    %v3059 = vunpack.c.l.b16 %v2988
    %v3060 = vpack.c.b16 %v3029, %v3028
    %v3061 = vpack.c.b16 %v3031, %v3030
    %v3062 = vpack.c.b16 %v3033, %v3032
    %v3063 = vpack.c.b16 %v3035, %v3034
    %v3064 = vpack.c.b16 %v3037, %v3036
    %v3065 = vpack.c.b16 %v3039, %v3038
    %v3066 = vpack.c.b16 %v3041, %v3040
    %v3067 = vpack.c.b16 %v3043, %v3042
    %v3068 = vpack.c.b16 %v3045, %v3044
    %v3069 = vpack.c.b16 %v3047, %v3046
    %v3070 = vpack.c.b16 %v3049, %v3048
    %v3071 = vpack.c.b16 %v3051, %v3050
    %v3072 = vpack.c.b16 %v3053, %v3052
    %v3073 = vpack.c.b16 %v3055, %v3054
    %v3074 = vpack.c.b16 %v3057, %v3056
    %v3075 = vpack.c.b16 %v3059, %v3058
    %3092 = vmatprep.subr.bf16.mxu0 0
    %3093 = vmatpush1.bf16.msra.mxu0 %v3060
    %3094 = vmatprep.subr.bf16.mxu0 0
    %3095 = vmatpush1.bf16.msra.mxu0 %v3061
    %3096 = vmatprep.subr.bf16.mxu0 0
    %3097 = vmatpush1.bf16.msra.mxu0 %v3062
    %3098 = vmatprep.subr.bf16.mxu0 0
    %3099 = vmatpush1.bf16.msra.mxu0 %v3063
    %3100 = vmatprep.subr.bf16.mxu0 0
    %3101 = vmatpush1.bf16.msra.mxu0 %v3064
    %3102 = vmatprep.subr.bf16.mxu0 0
    %3103 = vmatpush1.bf16.msra.mxu0 %v3065
    %3104 = vmatprep.subr.bf16.mxu0 0
    %3105 = vmatpush1.bf16.msra.mxu0 %v3066
    %3106 = vmatprep.subr.bf16.mxu0 0
    %3107 = vmatpush1.bf16.msra.mxu0 %v3067
    %3108 = vmatprep.subr.bf16.mxu0 0
    %3109 = vmatpush1.bf16.msra.mxu0 %v3068
    %3110 = vmatprep.subr.bf16.mxu0 0
    %3111 = vmatpush1.bf16.msra.mxu0 %v3069
    %3112 = vmatprep.subr.bf16.mxu0 0
    %3113 = vmatpush1.bf16.msra.mxu0 %v3070
    %3114 = vmatprep.subr.bf16.mxu0 0
    %3115 = vmatpush1.bf16.msra.mxu0 %v3071
    %3116 = vmatprep.subr.bf16.mxu0 0
    %3117 = vmatpush1.bf16.msra.mxu0 %v3072
    %3118 = vmatprep.subr.bf16.mxu0 0
    %3119 = vmatpush1.bf16.msra.mxu0 %v3073
    %3120 = vmatprep.subr.bf16.mxu0 0
    %3121 = vmatpush1.bf16.msra.mxu0 %v3074
    %3122 = vmatprep.subr.bf16.mxu0 0
    %3123 = vmatpush1.bf16.msra.mxu0 %v3075
    %3124 = vmatprep.mubr.bf16.mxu0 %v2956
    %3125 = vmatmul.mubr.bf16.gmra.mrb[0].mxu0 %v2955
    %v3126 = vpop.f32.mrb[0].mxu0
    %v3127 = vadd.f32 %v2994, %v3126
    %v3128 = vpop.f32.mrb[0].mxu0
    %v3129 = vpop.f32.mrb[0].mxu0
    %v3130 = vadd.f32 %v2994, %v3129
    %v3131 = vpop.f32.mrb[0].mxu0
    %3132 = vdwg.mxu0
    %v3133 = vld [vmem:[#allocation5] sm:$0xff]
    %v3134 = vld [vmem:[#allocation5 + $0x8] sm:$0xff]
    %v3135 = vld [vmem:[#allocation7] sm:$0xff]
    %v3136 = vld [vmem:[#allocation7 + $0x8] sm:$0xff]
    %vm3137 = vcmask 130048
    %v3138 = vsel %vm3137, %v3133, 0.0
    %v3139 = vsel %vm3137, %v3134, 0.0
    %v3140 = vsel %vm3137, %v3135, 0.0
    %v3141 = vsel %vm3137, %v3136, 0.0
    %v3142 = vsub.f32 %v3127, %v3138
    %v3143 = vsub.f32 %v3130, %v3139
    %v3144 = vmul.f32 %v3142, %v3142
    %v3145 = vmul.f32 %v3143, %v3143
    %v3146 = vmul.f32 %v3144, %v3140
    %v3147 = vmul.f32 %v3145, %v3141
    %v3148 = vld [vmem:[#allocation14] sm:$0xff]
    %v3149 = vadd.f32 %v3146, %v3147
    %v3150 = vadd.f32 %v3148, %v3149
    %3151 = vst [vmem:[#allocation14] sm:$0xff] %v3150
    %v3152 = vld [vmem:[#allocation15] sm:$0xff]
    %v3153 = vadd.f32 %v3140, %v3141
    %v3154 = vadd.f32 %v3152, %v3153
    %3155 = vst [vmem:[#allocation15] sm:$0xff] %v3154
    // Predicated region
    $region78: #{tpu_custom_call.1} parent=1 // pred_check
      _
    $region79: #{tpu_custom_call.1} parent=1 // pred_check_branch
      %3157 = sbr.rel (0) target = $region81
    $region80: #{tpu_custom_call.1} parent=1 // pred_region
      %s3159 = ssub.s32 128, 128
      %3160 = vsyncadd [#allocation4], %s3159
      %s3162 = sshll.u32 [#allocation14], 4
      %s3163 = int_to_ptr.vmem [resolvable:$true] %s3162
      %3165 = dma.vmem_to_hbm [thread:$0]  %s3163, 128, %s11, [#allocation4]
    $region81: #{tpu_custom_call.1} parent=1 // pred_fallthru
      _
    // Predicated region
    $region82: #{tpu_custom_call.1} parent=1 // pred_check
      _
    $region83: #{tpu_custom_call.1} parent=1 // pred_check_branch
      %3167 = sbr.rel (0) target = $region85
    $region84: #{tpu_custom_call.1} parent=1 // pred_region
      %s3169 = ssub.s32 128, 128
      %3170 = vsyncadd [#allocation16], %s3169
      %s3172 = sshll.u32 [#allocation15], 4
      %s3173 = int_to_ptr.vmem [resolvable:$true] %s3172
      %3175 = dma.vmem_to_hbm [thread:$0]  %s3173, 128, %s12, [#allocation16]
    $region85: #{tpu_custom_call.1} parent=1 // pred_fallthru
      _
    // Predicated region
    $region86: #{tpu_custom_call.1} parent=1 // pred_check
      _
    $region87: #{tpu_custom_call.1} parent=1 // pred_check_branch
      %3177 = sbr.rel (0) target = $region89
    $region88: #{tpu_custom_call.1} parent=1 // pred_region
      %3178 = dma.done [#allocation4], 128
    $region89: #{tpu_custom_call.1} parent=1 // pred_fallthru
      _
    // Predicated region
    $region90: #{tpu_custom_call.1} parent=1 // pred_check
      _
    $region91: #{tpu_custom_call.1} parent=1 // pred_check_branch
      %3180 = sbr.rel (0) target = $region93
    $region92: #{tpu_custom_call.1} parent=1 // pred_region
      %3181 = dma.done [#allocation16], 128
    $region93: #{tpu_custom_call.1} parent=1 // pred_fallthru
      _
    %3182 = vsyncpa [#allocation3], 1
    %3183 = vsyncpa [#allocation6], 1
    %3184 = vsyncpa [#allocation9], 1
    %3185 = vsyncpa [#allocation12], 1
    %3186 = vsyncpa [#allocation4], 1
    %3187 = vsyncpa [#allocation16], 1

</llo_original>
